<compile_context>
chip_gen: v6e
topology: v6e:2x2x1
jax: 0.10.0
libtpu: 0.0.40
codegen_flags: <defaults>
</compile_context>

<pallas_src>
import functools

import jax
import jax.numpy as jnp
from jax.experimental import pallas as pl
from jax.experimental.pallas import tpu as pltpu


# -----------------------------------------------------------------------------
# In-kernel conv helper: "same" conv on a padded (Hp, Wp, Cin) f32 value.
# -----------------------------------------------------------------------------
def _conv_gemm(xp, w_ref, H, W, K, Cin):
    """xp: (H+2p, W+2p, Cin) float32 (zero-padded). w_ref: (K*K*Cin, Cout) bf16.

    Returns the conv output as a (H*W, Cout) float32 accumulator.
    """
    if Cin % 8 == 0:
        # im2col slab -> single fat matmul (contraction depth K*K*Cin).
        taps = [xp[ky:ky + H, kx:kx + W, :].reshape(H * W, Cin)
                for ky in range(K) for kx in range(K)]
        slab = jnp.concatenate(taps, axis=-1).astype(jnp.bfloat16)
        return jnp.dot(slab, w_ref[...], preferred_element_type=jnp.float32)

    # Narrow-channel fallback (e.g. 3-channel init conv): per-tap matmuls.
    Cout = w_ref.shape[-1]
    w = w_ref[...]
    acc = jnp.zeros((H * W, Cout), jnp.float32)
    t = 0
    for ky in range(K):
        for kx in range(K):
            tap = xp[ky:ky + H, kx:kx + W, :].reshape(H * W, Cin)
            acc = acc + jnp.dot(tap.astype(jnp.bfloat16),
                                w[t * Cin:(t + 1) * Cin, :],
                                preferred_element_type=jnp.float32)
            t += 1
    return acc


# -----------------------------------------------------------------------------
# Generic conv kernel: optional fused input add (global skip), optional ReLU,
# optionally writes a zero-padded output block (persistent padded trunk).
# -----------------------------------------------------------------------------
def _conv_kernel(*args, H, W, K, Cin, Cout, relu, pad_out, fuse_add):
    i = 0
    x_ref = args[i]; i += 1
    if fuse_add:
        add_ref = args[i]; i += 1
    w_ref = args[i]
    b_ref = args[i + 1]
    out_ref = args[i + 2]
    opad_ref = args[i + 3] if pad_out else None
    p = K // 2

    xp = x_ref[0].astype(jnp.float32)                    # (Hp, Wp, Cin)
    if fuse_add:
        xp = xp + add_ref[0].astype(jnp.float32)         # fused global skip

    y = _conv_gemm(xp, w_ref, H, W, K, Cin)              # (H*W, Cout) f32
    y = y + b_ref[...]                                   # bias (1, Cout)
    if relu:
        y = jnp.maximum(y, 0.0)
    y = y.reshape(H, W, Cout)

    if pad_out:
        opad_ref[...] = jnp.zeros_like(opad_ref)
        opad_ref[p:p + H, p:p + W, :] = y
        out_ref[0] = opad_ref[...].astype(out_ref.dtype)
    else:
        out_ref[0] = y.astype(out_ref.dtype)


# -----------------------------------------------------------------------------
# Fused residual block kernel: conv -> ReLU -> conv -> *res_scale + skip.
# The intermediate activation lives only in VMEM scratch (hpad_ref).
# -----------------------------------------------------------------------------
def _res_block_kernel(x_ref, w1_ref, b1_ref, w2_ref, b2_ref, out_ref,
                      hpad_ref, ypad_ref, *, H, W, K, F, res_scale):
    p = K // 2

    xp = x_ref[0].astype(jnp.float32)                    # (Hp, Wp, F)

    # conv1 + bias + ReLU
    h = _conv_gemm(xp, w1_ref, H, W, K, F)
    h = jnp.maximum(h + b1_ref[...], 0.0)

    # re-pad h inside VMEM for conv2 (no HBM round trip)
    hpad_ref[...] = jnp.zeros_like(hpad_ref)
    hpad_ref[p:p + H, p:p + W, :] = h.reshape(H, W, F)

    # conv2 + bias, residual scale, local skip (all f32)
    y = _conv_gemm(hpad_ref[...], w2_ref, H, W, K, F)
    y = (y + b2_ref[...]) * res_scale
    y = y + xp[p:p + H, p:p + W, :].reshape(H * W, F)

    # write padded output block (borders stay zero for the next conv)
    ypad_ref[...] = jnp.zeros_like(ypad_ref)
    ypad_ref[p:p + H, p:p + W, :] = y.reshape(H, W, F)
    out_ref[0] = ypad_ref[...].astype(out_ref.dtype)


# -----------------------------------------------------------------------------
# Wrappers
# -----------------------------------------------------------------------------
_VMEM_LIMIT = 48 * 1024 * 1024


def conv2d_padded_in(x_pad, w, b, *, add=None, relu=False, pad_out=False,
                     out_dtype=jnp.bfloat16):
    """Conv on an already-padded NHWC input.

    x_pad: (N, H+2p, W+2p, Cin) bf16.  w: (K, K, Cin, Cout).  b: (Cout,).
    add:   optional (N, H+2p, W+2p, Cin) tensor added to the input (fused skip).
    pad_out: if True, output is written zero-padded (N, H+2p, W+2p, Cout).
    """
    N, Hp, Wp, Cin = x_pad.shape
    K = int(w.shape[0])
    Cout = int(w.shape[-1])
    p = K // 2
    H, W = Hp - 2 * p, Wp - 2 * p

    w2d = w.reshape(K * K * Cin, Cout).astype(jnp.bfloat16)
    b2 = b.reshape(1, Cout).astype(jnp.float32)

    kern = functools.partial(_conv_kernel, H=H, W=W, K=K, Cin=Cin, Cout=Cout,
                             relu=relu, pad_out=pad_out,
                             fuse_add=add is not None)

    in_specs = [pl.BlockSpec((1, Hp, Wp, Cin), lambda n: (n, 0, 0, 0))]
    operands = [x_pad]
    if add is not None:
        in_specs.append(pl.BlockSpec((1, Hp, Wp, Cin), lambda n: (n, 0, 0, 0)))
        operands.append(add)
    in_specs += [pl.BlockSpec((K * K * Cin, Cout), lambda n: (0, 0)),
                 pl.BlockSpec((1, Cout), lambda n: (0, 0))]
    operands += [w2d, b2]

    if pad_out:
        out_shape = jax.ShapeDtypeStruct((N, Hp, Wp, Cout), out_dtype)
        out_spec = pl.BlockSpec((1, Hp, Wp, Cout), lambda n: (n, 0, 0, 0))
        scratch = [pltpu.VMEM((Hp, Wp, Cout), jnp.float32)]
    else:
        out_shape = jax.ShapeDtypeStruct((N, H, W, Cout), out_dtype)
        out_spec = pl.BlockSpec((1, H, W, Cout), lambda n: (n, 0, 0, 0))
        scratch = []

    return pl.pallas_call(
        kern,
        out_shape=out_shape,
        grid=(N,),
        in_specs=in_specs,
        out_specs=out_spec,
        scratch_shapes=scratch,
        compiler_params=pltpu.CompilerParams(
            dimension_semantics=("parallel",),
            vmem_limit_bytes=_VMEM_LIMIT),
    )(*operands)


def res_block(x_pad, w1, b1, w2, b2, *, res_scale):
    """Fused EDSR residual block on a padded bf16 feature map."""
    N, Hp, Wp, F = x_pad.shape
    K = int(w1.shape[0])
    p = K // 2
    H, W = Hp - 2 * p, Wp - 2 * p

    w1_2d = w1.reshape(K * K * F, F).astype(jnp.bfloat16)
    w2_2d = w2.reshape(K * K * F, F).astype(jnp.bfloat16)
    b1_2 = b1.reshape(1, F).astype(jnp.float32)
    b2_2 = b2.reshape(1, F).astype(jnp.float32)

    kern = functools.partial(_res_block_kernel, H=H, W=W, K=K, F=F,
                             res_scale=float(res_scale))

    return pl.pallas_call(
        kern,
        out_shape=jax.ShapeDtypeStruct((N, Hp, Wp, F), jnp.bfloat16),
        grid=(N,),
        in_specs=[
            pl.BlockSpec((1, Hp, Wp, F), lambda n: (n, 0, 0, 0)),
            pl.BlockSpec((K * K * F, F), lambda n: (0, 0)),
            pl.BlockSpec((1, F), lambda n: (0, 0)),
            pl.BlockSpec((K * K * F, F), lambda n: (0, 0)),
            pl.BlockSpec((1, F), lambda n: (0, 0)),
        ],
        out_specs=pl.BlockSpec((1, Hp, Wp, F), lambda n: (n, 0, 0, 0)),
        scratch_shapes=[pltpu.VMEM((Hp, Wp, F), jnp.float32),   # padded h
                        pltpu.VMEM((Hp, Wp, F), jnp.float32)],  # padded out
        compiler_params=pltpu.CompilerParams(
            dimension_semantics=("parallel",),
            vmem_limit_bytes=_VMEM_LIMIT),
    )(x_pad, w1_2d, b1_2, w2_2d, b2_2)


def pixel_shuffle_nhwc(x, r):
    """NHWC equivalent of torch.nn.PixelShuffle(r) (pure layout glue)."""
    N, H, W, C = x.shape
    Cout = C // (r * r)
    x = x.reshape(N, H, W, Cout, r, r)
    x = jnp.transpose(x, (0, 1, 4, 2, 5, 3))   # N, H, r, W, r, Cout
    return x.reshape(N, H * r, W * r, Cout)


# -----------------------------------------------------------------------------
# Parameters (deterministic synthetic weights, matching the PyTorch shapes).
# TODO(synk): if real PyTorch weights are loaded, verify OIHW -> (K,K,Cin,Cout)
# transpose and the PixelShuffle channel ordering of the upsampler conv.
# -----------------------------------------------------------------------------
def init_params(key, *, img_channels, num_features, kernel_size,
                num_residual_blocks, residual_scale, lr_scale):
    K, F, C, r = kernel_size, num_features, img_channels, lr_scale

    def conv_init(k, cin, cout):
        kw, kb = jax.random.split(k)
        w = 0.1 * jax.random.normal(kw, (K, K, cin, cout), jnp.float32)
        b = 0.05 * jax.random.normal(kb, (cout,), jnp.float32)
        return w, b

    keys = jax.random.split(key, 3 + 2 * num_residual_blocks)
    init_w, init_b = conv_init(keys[0], C, F)
    blocks = []
    for i in range(num_residual_blocks):
        w1, b1 = conv_init(keys[1 + 2 * i], F, F)
        w2, b2 = conv_init(keys[2 + 2 * i], F, F)
        blocks.append((w1, b1, w2, b2))
    up_w, up_b = conv_init(keys[-2], F, F * r * r)     # Upsampler conv
    fin_w, fin_b = conv_init(keys[-1], F, C)           # final conv
    return dict(init_w=init_w, init_b=init_b, blocks=blocks,
                up_w=up_w, up_b=up_b, final_w=fin_w, final_b=fin_b,
                res_scale=residual_scale, r=r)


# -----------------------------------------------------------------------------
# EDSR forward (NCHW in / NCHW out, like the PyTorch module).
# -----------------------------------------------------------------------------
def edsr_forward(x_nchw, params):
    r = params["r"]
    x = jnp.transpose(x_nchw, (0, 2, 3, 1))            # -> NHWC

    Ki = params["init_w"].shape[0]
    p = Ki // 2
    x_pad = jnp.pad(x.astype(jnp.bfloat16), ((0, 0), (p, p), (p, p), (0, 0)))

    # init_layer (output kept zero-padded in HBM for the whole trunk)
    x = conv2d_padded_in(x_pad, params["init_w"], params["init_b"],
                         pad_out=True)
    global_skip = x

    # residual_layer: each block fully fused in one pallas_call
    for (w1, b1, w2, b2) in params["blocks"]:
        x = res_block(x, w1, b1, w2, b2, res_scale=params["res_scale"])

    # upsample: global residual add fused into the Upsampler conv's input
    x = conv2d_padded_in(x, params["up_w"], params["up_b"],
                         add=global_skip, pad_out=False)
    x = pixel_shuffle_nhwc(x, r)

    # final conv (pad its input once; f32 output)
    Kf = params["final_w"].shape[0]
    pf = Kf // 2
    x_pad2 = jnp.pad(x, ((0, 0), (pf, pf), (pf, pf), (0, 0)))
    y = conv2d_padded_in(x_pad2, params["final_w"], params["final_b"],
                         pad_out=False, out_dtype=jnp.float32)

    return jnp.transpose(y, (0, 3, 1, 2))               # -> NCHW


if __name__ == "__main__":
    cfg = dict(img_channels=3, num_features=32, kernel_size=3,
               num_residual_blocks=2, residual_scale=0.1, lr_scale=2)
    N, H, W = 2, 16, 16

    key = jax.random.PRNGKey(0)
    kp, kx = jax.random.split(key)
    params = init_params(kp, **cfg)
    x = jax.random.normal(kx, (N, cfg["img_channels"], H, W), jnp.float32)

    y = edsr_forward(x, params)
    jax.block_until_ready(y)

    assert y.shape == (N, cfg["img_channels"], H * cfg["lr_scale"],
                       W * cfg["lr_scale"]), y.shape
    assert jnp.all(jnp.isfinite(y))
    print("KERNEL_OK")
</pallas_src>

<mosaic_0001>
module attributes {stable_mosaic.version = 11 : i64} {
  func.func @_conv_kernel(%arg0: i32, %arg1: memref<1x18x18x3xbf16, #tpu.memory_space<vmem>>, %arg2: memref<27x32xbf16, #tpu.memory_space<vmem>>, %arg3: memref<1x32xf32, #tpu.memory_space<vmem>>, %arg4: memref<1x18x18x32xbf16, #tpu.memory_space<vmem>>, %arg5: memref<18x18x32xf32, #tpu.memory_space<vmem>>) attributes {dimension_semantics = [#tpu.dimension_semantics<parallel>], iteration_bounds = array<i64: 2>, scalar_prefetch = 0 : i64, scratch_operands = 1 : i64, tpu.core_type = #tpu.core_type<tc>, window_params = [{transform_indices = @transform_0, window_bounds = array<i64: 1, 18, 18, 3>}, {pipeline_mode = #tpu.pipeline_mode<synchronous>, transform_indices = @transform_1, window_bounds = array<i64: 27, 32>}, {pipeline_mode = #tpu.pipeline_mode<synchronous>, transform_indices = @transform_2, window_bounds = array<i64: 1, 32>}, {transform_indices = @transform_3, window_bounds = array<i64: 1, 18, 18, 32>}]} {
    %c0 = arith.constant 0 : index
    %c0_0 = arith.constant 0 : index
    %c0_1 = arith.constant 0 : index
    %c0_2 = arith.constant 0 : index
    %0 = vector.load %arg1[%c0, %c0_0, %c0_1, %c0_2] : memref<1x18x18x3xbf16, #tpu.memory_space<vmem>>, vector<1x18x18x3xbf16>
    %1 = vector.shape_cast %0 : vector<1x18x18x3xbf16> to vector<18x18x3xbf16>
    %2 = arith.extf %1 : vector<18x18x3xbf16> to vector<18x18x3xf32>
    %c0_3 = arith.constant 0 : index
    %c0_4 = arith.constant 0 : index
    %3 = vector.load %arg2[%c0_3, %c0_4] : memref<27x32xbf16, #tpu.memory_space<vmem>>, vector<27x32xbf16>
    %cst = arith.constant 0.000000e+00 : f32
    %4 = vector.broadcast %cst : f32 to vector<256x32xf32>
    %5 = vector.extract_strided_slice %2 {offsets = [0, 0, 0], sizes = [16, 16, 3], strides = [1, 1, 1]} : vector<18x18x3xf32> to vector<16x16x3xf32>
    %6 = vector.shape_cast %5 : vector<16x16x3xf32> to vector<256x3xf32>
    %7 = arith.truncf %6 : vector<256x3xf32> to vector<256x3xbf16>
    %8 = vector.extract_strided_slice %3 {offsets = [0, 0], sizes = [3, 32], strides = [1, 1]} : vector<27x32xbf16> to vector<3x32xbf16>
    %cst_5 = arith.constant dense<0.000000e+00> : vector<256x32xf32>
    %9 = tpu.matmul %7, %8, %cst_5 {dimension_numbers = #tpu.dot_dimension_numbers<[1], [0], [0], [1], [0, 0, 1, 1], [], []>} : vector<256x3xbf16>, vector<3x32xbf16>, vector<256x32xf32> -> vector<256x32xf32>
    %10 = arith.addf %4, %9 : vector<256x32xf32>
    %11 = vector.extract_strided_slice %2 {offsets = [0, 1, 0], sizes = [16, 16, 3], strides = [1, 1, 1]} : vector<18x18x3xf32> to vector<16x16x3xf32>
    %12 = vector.shape_cast %11 : vector<16x16x3xf32> to vector<256x3xf32>
    %13 = arith.truncf %12 : vector<256x3xf32> to vector<256x3xbf16>
    %14 = vector.extract_strided_slice %3 {offsets = [3, 0], sizes = [3, 32], strides = [1, 1]} : vector<27x32xbf16> to vector<3x32xbf16>
    %cst_6 = arith.constant dense<0.000000e+00> : vector<256x32xf32>
    %15 = tpu.matmul %13, %14, %cst_6 {dimension_numbers = #tpu.dot_dimension_numbers<[1], [0], [0], [1], [0, 0, 1, 1], [], []>} : vector<256x3xbf16>, vector<3x32xbf16>, vector<256x32xf32> -> vector<256x32xf32>
    %16 = arith.addf %10, %15 : vector<256x32xf32>
    %17 = vector.extract_strided_slice %2 {offsets = [0, 2, 0], sizes = [16, 16, 3], strides = [1, 1, 1]} : vector<18x18x3xf32> to vector<16x16x3xf32>
    %18 = vector.shape_cast %17 : vector<16x16x3xf32> to vector<256x3xf32>
    %19 = arith.truncf %18 : vector<256x3xf32> to vector<256x3xbf16>
    %20 = vector.extract_strided_slice %3 {offsets = [6, 0], sizes = [3, 32], strides = [1, 1]} : vector<27x32xbf16> to vector<3x32xbf16>
    %cst_7 = arith.constant dense<0.000000e+00> : vector<256x32xf32>
    %21 = tpu.matmul %19, %20, %cst_7 {dimension_numbers = #tpu.dot_dimension_numbers<[1], [0], [0], [1], [0, 0, 1, 1], [], []>} : vector<256x3xbf16>, vector<3x32xbf16>, vector<256x32xf32> -> vector<256x32xf32>
    %22 = arith.addf %16, %21 : vector<256x32xf32>
    %23 = vector.extract_strided_slice %2 {offsets = [1, 0, 0], sizes = [16, 16, 3], strides = [1, 1, 1]} : vector<18x18x3xf32> to vector<16x16x3xf32>
    %24 = vector.shape_cast %23 : vector<16x16x3xf32> to vector<256x3xf32>
    %25 = arith.truncf %24 : vector<256x3xf32> to vector<256x3xbf16>
    %26 = vector.extract_strided_slice %3 {offsets = [9, 0], sizes = [3, 32], strides = [1, 1]} : vector<27x32xbf16> to vector<3x32xbf16>
    %cst_8 = arith.constant dense<0.000000e+00> : vector<256x32xf32>
    %27 = tpu.matmul %25, %26, %cst_8 {dimension_numbers = #tpu.dot_dimension_numbers<[1], [0], [0], [1], [0, 0, 1, 1], [], []>} : vector<256x3xbf16>, vector<3x32xbf16>, vector<256x32xf32> -> vector<256x32xf32>
    %28 = arith.addf %22, %27 : vector<256x32xf32>
    %29 = vector.extract_strided_slice %2 {offsets = [1, 1, 0], sizes = [16, 16, 3], strides = [1, 1, 1]} : vector<18x18x3xf32> to vector<16x16x3xf32>
    %30 = vector.shape_cast %29 : vector<16x16x3xf32> to vector<256x3xf32>
    %31 = arith.truncf %30 : vector<256x3xf32> to vector<256x3xbf16>
    %32 = vector.extract_strided_slice %3 {offsets = [12, 0], sizes = [3, 32], strides = [1, 1]} : vector<27x32xbf16> to vector<3x32xbf16>
    %cst_9 = arith.constant dense<0.000000e+00> : vector<256x32xf32>
    %33 = tpu.matmul %31, %32, %cst_9 {dimension_numbers = #tpu.dot_dimension_numbers<[1], [0], [0], [1], [0, 0, 1, 1], [], []>} : vector<256x3xbf16>, vector<3x32xbf16>, vector<256x32xf32> -> vector<256x32xf32>
    %34 = arith.addf %28, %33 : vector<256x32xf32>
    %35 = vector.extract_strided_slice %2 {offsets = [1, 2, 0], sizes = [16, 16, 3], strides = [1, 1, 1]} : vector<18x18x3xf32> to vector<16x16x3xf32>
    %36 = vector.shape_cast %35 : vector<16x16x3xf32> to vector<256x3xf32>
    %37 = arith.truncf %36 : vector<256x3xf32> to vector<256x3xbf16>
    %38 = vector.extract_strided_slice %3 {offsets = [15, 0], sizes = [3, 32], strides = [1, 1]} : vector<27x32xbf16> to vector<3x32xbf16>
    %cst_10 = arith.constant dense<0.000000e+00> : vector<256x32xf32>
    %39 = tpu.matmul %37, %38, %cst_10 {dimension_numbers = #tpu.dot_dimension_numbers<[1], [0], [0], [1], [0, 0, 1, 1], [], []>} : vector<256x3xbf16>, vector<3x32xbf16>, vector<256x32xf32> -> vector<256x32xf32>
    %40 = arith.addf %34, %39 : vector<256x32xf32>
    %41 = vector.extract_strided_slice %2 {offsets = [2, 0, 0], sizes = [16, 16, 3], strides = [1, 1, 1]} : vector<18x18x3xf32> to vector<16x16x3xf32>
    %42 = vector.shape_cast %41 : vector<16x16x3xf32> to vector<256x3xf32>
    %43 = arith.truncf %42 : vector<256x3xf32> to vector<256x3xbf16>
    %44 = vector.extract_strided_slice %3 {offsets = [18, 0], sizes = [3, 32], strides = [1, 1]} : vector<27x32xbf16> to vector<3x32xbf16>
    %cst_11 = arith.constant dense<0.000000e+00> : vector<256x32xf32>
    %45 = tpu.matmul %43, %44, %cst_11 {dimension_numbers = #tpu.dot_dimension_numbers<[1], [0], [0], [1], [0, 0, 1, 1], [], []>} : vector<256x3xbf16>, vector<3x32xbf16>, vector<256x32xf32> -> vector<256x32xf32>
    %46 = arith.addf %40, %45 : vector<256x32xf32>
    %47 = vector.extract_strided_slice %2 {offsets = [2, 1, 0], sizes = [16, 16, 3], strides = [1, 1, 1]} : vector<18x18x3xf32> to vector<16x16x3xf32>
    %48 = vector.shape_cast %47 : vector<16x16x3xf32> to vector<256x3xf32>
    %49 = arith.truncf %48 : vector<256x3xf32> to vector<256x3xbf16>
    %50 = vector.extract_strided_slice %3 {offsets = [21, 0], sizes = [3, 32], strides = [1, 1]} : vector<27x32xbf16> to vector<3x32xbf16>
    %cst_12 = arith.constant dense<0.000000e+00> : vector<256x32xf32>
    %51 = tpu.matmul %49, %50, %cst_12 {dimension_numbers = #tpu.dot_dimension_numbers<[1], [0], [0], [1], [0, 0, 1, 1], [], []>} : vector<256x3xbf16>, vector<3x32xbf16>, vector<256x32xf32> -> vector<256x32xf32>
    %52 = arith.addf %46, %51 : vector<256x32xf32>
    %53 = vector.extract_strided_slice %2 {offsets = [2, 2, 0], sizes = [16, 16, 3], strides = [1, 1, 1]} : vector<18x18x3xf32> to vector<16x16x3xf32>
    %54 = vector.shape_cast %53 : vector<16x16x3xf32> to vector<256x3xf32>
    %55 = arith.truncf %54 : vector<256x3xf32> to vector<256x3xbf16>
    %56 = vector.extract_strided_slice %3 {offsets = [24, 0], sizes = [3, 32], strides = [1, 1]} : vector<27x32xbf16> to vector<3x32xbf16>
    %cst_13 = arith.constant dense<0.000000e+00> : vector<256x32xf32>
    %57 = tpu.matmul %55, %56, %cst_13 {dimension_numbers = #tpu.dot_dimension_numbers<[1], [0], [0], [1], [0, 0, 1, 1], [], []>} : vector<256x3xbf16>, vector<3x32xbf16>, vector<256x32xf32> -> vector<256x32xf32>
    %58 = arith.addf %52, %57 : vector<256x32xf32>
    %c0_14 = arith.constant 0 : index
    %c0_15 = arith.constant 0 : index
    %59 = vector.load %arg3[%c0_14, %c0_15] : memref<1x32xf32, #tpu.memory_space<vmem>>, vector<1x32xf32>
    %60 = vector.broadcast %59 : vector<1x32xf32> to vector<256x32xf32>
    %61 = arith.addf %58, %60 : vector<256x32xf32>
    %62 = vector.shape_cast %61 : vector<256x32xf32> to vector<16x16x32xf32>
    %cst_16 = arith.constant 0.000000e+00 : f32
    %63 = vector.broadcast %cst_16 : f32 to vector<18x18x32xf32>
    %c0_17 = arith.constant 0 : index
    %c0_18 = arith.constant 0 : index
    %c0_19 = arith.constant 0 : index
    %64 = vector.load %arg5[%c0_17, %c0_18, %c0_19] : memref<18x18x32xf32, #tpu.memory_space<vmem>>, vector<18x18x32xf32>
    tpu.vector_store %arg5[%c0_17, %c0_18, %c0_19], %63 {strides = array<i32>} : memref<18x18x32xf32, #tpu.memory_space<vmem>>, vector<18x18x32xf32>,
    %c1 = arith.constant 1 : index
    %c1_20 = arith.constant 1 : index
    %c0_21 = arith.constant 0 : index
    %65 = vector.load %arg5[%c1, %c1_20, %c0_21] : memref<18x18x32xf32, #tpu.memory_space<vmem>>, vector<16x16x32xf32>
    tpu.vector_store %arg5[%c1, %c1_20, %c0_21], %62 {strides = array<i32>} : memref<18x18x32xf32, #tpu.memory_space<vmem>>, vector<16x16x32xf32>,
    %c0_22 = arith.constant 0 : index
    %c0_23 = arith.constant 0 : index
    %c0_24 = arith.constant 0 : index
    %66 = vector.load %arg5[%c0_22, %c0_23, %c0_24] : memref<18x18x32xf32, #tpu.memory_space<vmem>>, vector<18x18x32xf32>
    %67 = arith.truncf %66 : vector<18x18x32xf32> to vector<18x18x32xbf16>
    %c0_25 = arith.constant 0 : index
    %c0_26 = arith.constant 0 : index
    %c0_27 = arith.constant 0 : index
    %c0_28 = arith.constant 0 : index
    %68 = vector.load %arg4[%c0_25, %c0_26, %c0_27, %c0_28] : memref<1x18x18x32xbf16, #tpu.memory_space<vmem>>, vector<1x18x18x32xbf16>
    %69 = vector.shape_cast %68 : vector<1x18x18x32xbf16> to vector<18x18x32xbf16>
    %70 = vector.shape_cast %67 : vector<18x18x32xbf16> to vector<1x18x18x32xbf16>
    tpu.vector_store %arg4[%c0_25, %c0_26, %c0_27, %c0_28], %70 {strides = array<i32>} : memref<1x18x18x32xbf16, #tpu.memory_space<vmem>>, vector<1x18x18x32xbf16>,
    return
  }
  func.func @transform_0(%arg0: i32) -> (i32, i32, i32, i32) {
    %c0_i32 = arith.constant 0 : i32
    %c0_i32_0 = arith.constant 0 : i32
    %c0_i32_1 = arith.constant 0 : i32
    %c0_i32_2 = arith.constant 0 : i32
    return %arg0, %c0_i32, %c0_i32_0, %c0_i32_1 : i32, i32, i32, i32
  }
  func.func @transform_1(%arg0: i32) -> (i32, i32) {
    %c0_i32 = arith.constant 0 : i32
    %c0_i32_0 = arith.constant 0 : i32
    %c0_i32_1 = arith.constant 0 : i32
    return %c0_i32, %c0_i32_0 : i32, i32
  }
  func.func @transform_2(%arg0: i32) -> (i32, i32) {
    %c0_i32 = arith.constant 0 : i32
    %c0_i32_0 = arith.constant 0 : i32
    %c0_i32_1 = arith.constant 0 : i32
    return %c0_i32, %c0_i32_0 : i32, i32
  }
  func.func @transform_3(%arg0: i32) -> (i32, i32, i32, i32) {
    %c0_i32 = arith.constant 0 : i32
    %c0_i32_0 = arith.constant 0 : i32
    %c0_i32_1 = arith.constant 0 : i32
    %c0_i32_2 = arith.constant 0 : i32
    return %arg0, %c0_i32, %c0_i32_0, %c0_i32_1 : i32, i32, i32, i32
  }
}

</mosaic_0001>

<llo_original>
// kernel: tpu_custom_call.1
$region0: #{tpu_custom_call.1}
  #allocation0 [shape = 'u32[]', space=smem, size = 0x4, offset = 0x4, fixed_abs, tag = 'smem constant byte address 0x4 - core index']
  #allocation1 [shape = 'u32[144,128]{1,0:T(1,128)}', space=vmem, size = 0x12000, scoped, tag = 'internal scratch']
  #allocation2 [shape = 'f32[18,18,32]{2,1,0:T(8,128)}', space=vmem, size = 0x36000, scoped, tag = 'scratch operand']
  %s0 = inlined_call_operand.vmem [shape: bf16[2,18,18,3], index: 0, kind: input, shape index: {}]
  %s1 = inlined_call_operand.vmem [shape: bf16[27,32], index: 1, kind: input, shape index: {}]
  %s2 = inlined_call_operand.vmem [shape: f32[1,32], index: 2, kind: input, shape index: {}]
  %s3 = inlined_call_operand.vmem [shape: bf16[2,18,18,32], index: 3, kind: output, shape index: {}]
  %s4 = sld [smem:[#allocation0]]
  $region45: #{tpu_custom_call.1} parent=0
    _
  %s6 = ssub.s32 1, %s4
  %s7 = scalar_select 0, %s6, %s4
  loop: start=0, step=1, limit=4
  $region2: #{tpu_custom_call.1} parent=0 // loop_pre_header
    _
  $region3: #{tpu_custom_call.1} parent=0 // loop_header
    %s9 = sphi 0, %s13
    %p10 = scmp.ge.s32.totalorder %s9, 4
    %s19 = sphi 0, %s21
    %s22 = sphi 0, %s19
    %s23 = sphi 0, %s22
    %s39 = sphi 0, %s23
    %s43 = sphi 0, %s43
    %s45 = sphi 0, %s43
    %s46 = sphi 0, %s45
    %s60 = sphi 0, %s46
    %s64 = sphi 0, %s64
    %s66 = sphi 0, %s64
    %s67 = sphi 0, %s66
    %s81 = sphi 0, %s67
    %s87 = sphi 0, %s89
    %s90 = sphi 0, %s87
    %s91 = sphi 0, %s90
    %s107 = sphi 0, %s91
  $region4: #{tpu_custom_call.1} parent=0 // loop_header_branch
    %12 = sbr.rel (%p10) target = $region8
  $region5: #{tpu_custom_call.1} parent=0 // loop_body
    %s14 = ssub.s32 %s9, 1
    %s15 = ssub.s32 %s9, 2
    %s16 = sadd.s32 %s9, 1
    %s17 = ssub.s32 %s9, %s16
    %p18 = scmp.eq.s32.totalorder %s17, 0
    %s20 = sadd.s32 %s19, 1
    %s21 = scalar_select %p18, %s19, %s20
    %p24 = pneg %p18
    %p25 = scmp.eq.s32.totalorder %s9, 1
    %p26 = por %p24, %p25
    %p27 = scmp.ne.s32.totalorder %s19, %s22
    %p28 = scmp.eq.s32.totalorder %s9, 0
    %p29 = por %p27, %p28
    %p30 = scmp.ne.s32.totalorder %s19, %s22
    %p31 = scmp.eq.s32.totalorder %s14, 1
    %p32 = por %p30, %p31
    %p33 = scmp.ne.s32.totalorder %s22, %s23
    %p34 = scmp.eq.s32.totalorder %s14, 0
    %p35 = por %p33, %p34
    %p36 = scmp.ne.s32.totalorder %s22, %s23
    %p37 = scmp.eq.s32.totalorder %s15, 1
    %p38 = por %p36, %p37
    %p40 = scmp.ne.s32.totalorder %s23, %s39
    %p41 = scmp.eq.s32.totalorder %s15, 0
    %p42 = por %p40, %p41
    %s44 = sadd.s32 %s43, 1
    %p47 = scmp.eq.s32.totalorder %s9, 1
    %p48 = scmp.ne.s32.totalorder %s43, %s45
    %p49 = scmp.eq.s32.totalorder %s9, 0
    %p50 = por %p48, %p49
    %p51 = scmp.ne.s32.totalorder %s43, %s45
    %p52 = scmp.eq.s32.totalorder %s14, 1
    %p53 = por %p51, %p52
    %p54 = scmp.ne.s32.totalorder %s45, %s46
    %p55 = scmp.eq.s32.totalorder %s14, 0
    %p56 = por %p54, %p55
    %p57 = scmp.ne.s32.totalorder %s45, %s46
    %p58 = scmp.eq.s32.totalorder %s15, 1
    %p59 = por %p57, %p58
    %p61 = scmp.ne.s32.totalorder %s46, %s60
    %p62 = scmp.eq.s32.totalorder %s15, 0
    %p63 = por %p61, %p62
    %s65 = sadd.s32 %s64, 1
    %p68 = scmp.eq.s32.totalorder %s9, 1
    %p69 = scmp.ne.s32.totalorder %s64, %s66
    %p70 = scmp.eq.s32.totalorder %s9, 0
    %p71 = por %p69, %p70
    %p72 = scmp.ne.s32.totalorder %s64, %s66
    %p73 = scmp.eq.s32.totalorder %s14, 1
    %p74 = por %p72, %p73
    %p75 = scmp.ne.s32.totalorder %s66, %s67
    %p76 = scmp.eq.s32.totalorder %s14, 0
    %p77 = por %p75, %p76
    %p78 = scmp.ne.s32.totalorder %s66, %s67
    %p79 = scmp.eq.s32.totalorder %s15, 1
    %p80 = por %p78, %p79
    %p82 = scmp.ne.s32.totalorder %s67, %s81
    %p83 = scmp.eq.s32.totalorder %s15, 0
    %p84 = por %p82, %p83
    %s85 = ssub.s32 %s9, %s16
    %p86 = scmp.eq.s32.totalorder %s85, 0
    %s88 = sadd.s32 %s87, 1
    %s89 = scalar_select %p86, %s87, %s88
    %p92 = pneg %p86
    %p93 = scmp.eq.s32.totalorder %s9, 1
    %p94 = por %p92, %p93
    %p95 = scmp.ne.s32.totalorder %s87, %s90
    %p96 = scmp.eq.s32.totalorder %s9, 0
    %p97 = por %p95, %p96
    %p98 = scmp.ne.s32.totalorder %s87, %s90
    %p99 = scmp.eq.s32.totalorder %s14, 1
    %p100 = por %p98, %p99
    %p101 = scmp.ne.s32.totalorder %s90, %s91
    %p102 = scmp.eq.s32.totalorder %s14, 0
    %p103 = por %p101, %p102
    %p104 = scmp.ne.s32.totalorder %s90, %s91
    %p105 = scmp.eq.s32.totalorder %s15, 1
    %p106 = por %p104, %p105
    %p108 = scmp.ne.s32.totalorder %s91, %s107
    %p109 = scmp.eq.s32.totalorder %s15, 0
    %p110 = por %p108, %p109
    %p111 = scmp.le.s32.totalorder 1, %s9
    %p112 = scmp.lt.s32.totalorder %s9, 3
    %p113 = pnand %p111, %p112
    %p114 = pneg %p113
    // Predicated region
    $region9: #{tpu_custom_call.1} parent=5 // pred_check
      _
    $region10: #{tpu_custom_call.1} parent=5 // pred_check_branch
      %116 = sbr.rel (%p113) target = $region12
    $region11: #{tpu_custom_call.1} parent=5 // pred_region
      %s117 = ssub.s32 %s9, 1
      // Predicated region
      $region13: #{tpu_custom_call.1} parent=11 // pred_check
        %p118 = pneg %p56
      $region14: #{tpu_custom_call.1} parent=11 // pred_check_branch
        %120 = sbr.rel (%p118) target = $region16
      $region15: #{tpu_custom_call.1} parent=11 // pred_region
        _
      $region16: #{tpu_custom_call.1} parent=11 // pred_fallthru
        _
      // Predicated region
      $region17: #{tpu_custom_call.1} parent=11 // pred_check
        %p121 = pneg %p77
      $region18: #{tpu_custom_call.1} parent=11 // pred_check_branch
        %123 = sbr.rel (%p121) target = $region20
      $region19: #{tpu_custom_call.1} parent=11 // pred_region
        _
      $region20: #{tpu_custom_call.1} parent=11 // pred_fallthru
        _
    $region12: #{tpu_custom_call.1} parent=5 // pred_fallthru
      _
    %p124 = scmp.lt.s32.totalorder %s9, 2
    // Predicated region
    $region21: #{tpu_custom_call.1} parent=5 // pred_check
      %p125 = pneg %p124
    $region22: #{tpu_custom_call.1} parent=5 // pred_check_branch
      %127 = sbr.rel (%p125) target = $region24
    $region23: #{tpu_custom_call.1} parent=5 // pred_region
      // Predicated region
      $region25: #{tpu_custom_call.1} parent=23 // pred_check
        %p128 = pneg %p29
      $region26: #{tpu_custom_call.1} parent=23 // pred_check_branch
        %130 = sbr.rel (%p128) target = $region28
      $region27: #{tpu_custom_call.1} parent=23 // pred_region
        %p131 = scmp.lt.s32.totalorder %s9, 1
        %s132 = scalar_select %p131, %s9, 1
        %s133 = smul.addr %s132, 54
        %s134 = smul.addr %s133, 4
        %s135 = scalar_lea.vmem %s0, %s134
      $region28: #{tpu_custom_call.1} parent=23 // pred_fallthru
        _
    $region24: #{tpu_custom_call.1} parent=5 // pred_fallthru
      _
    %p136 = scmp.le.s32.totalorder 1, %s9
    %p137 = scmp.lt.s32.totalorder %s9, 3
    %p138 = pnand %p136, %p137
    %p139 = pneg %p138
    // Predicated region
    $region29: #{tpu_custom_call.1} parent=5 // pred_check
      _
    $region30: #{tpu_custom_call.1} parent=5 // pred_check_branch
      %141 = sbr.rel (%p138) target = $region32
    $region31: #{tpu_custom_call.1} parent=5 // pred_region
      %s142 = ssub.s32 %s9, 1
      %p143 = scmp.lt.s32.totalorder %s14, 1
      %s144 = scalar_select %p143, %s14, 1
      %s145 = smul.addr %s144, 54
      %s146 = smul.addr %s145, 4
      %s147 = scalar_lea.vmem %s0, %s146
      %p148 = pneg %p35
      %p149 = pneg %p32
      %p150 = pneg %p56
      %p151 = pneg %p53
      %p152 = pneg %p77
      %p153 = pneg %p74
      %p154 = pneg %p103
      %p155 = pneg %p100
      %p156 = scmp.lt.s32.totalorder %s14, 1
      %s157 = scalar_select %p156, %s14, 1
      %s158 = smul.addr %s157, 54
      %s159 = smul.addr %s158, 4
      %s160 = scalar_lea.vmem %s3, %s159
      %p161 = scmp.lt.s32.totalorder %s14, 1
      %s162 = scalar_select %p161, %s14, 1
      %s163 = smul.addr %s162, 54
      %s164 = smul.addr %s163, 4
      %s165 = scalar_lea.vmem %s0, %s164
      %p166 = scmp.lt.s32.totalorder %s14, 1
      %s167 = scalar_select %p166, %s14, 1
      %s168 = smul.addr %s167, 54
      %s169 = smul.addr %s168, 4
      %s170 = scalar_lea.vmem %s3, %s169
      %v172 = vld [vmem:[%s165] sm:$0xf]
      %v173 = vld [vmem:[%s165 + $0x4] sm:$0xf]
      %v174 = vld [vmem:[%s165 + $0x8] sm:$0x1]
      %v175 = vld [vmem:[%s165 + $0xc] sm:$0xf]
      %v176 = vld [vmem:[%s165 + $0x10] sm:$0xf]
      %v177 = vld [vmem:[%s165 + $0x14] sm:$0x1]
      %v178 = vld [vmem:[%s165 + $0x18] sm:$0xf]
      %v179 = vld [vmem:[%s165 + $0x1c] sm:$0xf]
      %v180 = vld [vmem:[%s165 + $0x20] sm:$0x1]
      %v181 = vld [vmem:[%s165 + $0x24] sm:$0xf]
      %v182 = vld [vmem:[%s165 + $0x28] sm:$0xf]
      %v183 = vld [vmem:[%s165 + $0x2c] sm:$0x1]
      %v184 = vld [vmem:[%s165 + $0x30] sm:$0xf]
      %v185 = vld [vmem:[%s165 + $0x34] sm:$0xf]
      %v186 = vld [vmem:[%s165 + $0x38] sm:$0x1]
      %v187 = vld [vmem:[%s165 + $0x3c] sm:$0xf]
      %v188 = vld [vmem:[%s165 + $0x40] sm:$0xf]
      %v189 = vld [vmem:[%s165 + $0x44] sm:$0x1]
      %v190 = vld [vmem:[%s165 + $0x48] sm:$0xf]
      %v191 = vld [vmem:[%s165 + $0x4c] sm:$0xf]
      %v192 = vld [vmem:[%s165 + $0x50] sm:$0x1]
      %v193 = vld [vmem:[%s165 + $0x54] sm:$0xf]
      %v194 = vld [vmem:[%s165 + $0x58] sm:$0xf]
      %v195 = vld [vmem:[%s165 + $0x5c] sm:$0x1]
      %v196 = vld [vmem:[%s165 + $0x60] sm:$0xf]
      %v197 = vld [vmem:[%s165 + $0x64] sm:$0xf]
      %v198 = vld [vmem:[%s165 + $0x68] sm:$0x1]
      %v199 = vld [vmem:[%s165 + $0x6c] sm:$0xf]
      %v200 = vld [vmem:[%s165 + $0x70] sm:$0xf]
      %v201 = vld [vmem:[%s165 + $0x74] sm:$0x1]
      %v202 = vld [vmem:[%s165 + $0x78] sm:$0xf]
      %v203 = vld [vmem:[%s165 + $0x7c] sm:$0xf]
      %v204 = vld [vmem:[%s165 + $0x80] sm:$0x1]
      %v205 = vld [vmem:[%s165 + $0x84] sm:$0xf]
      %v206 = vld [vmem:[%s165 + $0x88] sm:$0xf]
      %v207 = vld [vmem:[%s165 + $0x8c] sm:$0x1]
      %v208 = vld [vmem:[%s165 + $0x90] sm:$0xf]
      %v209 = vld [vmem:[%s165 + $0x94] sm:$0xf]
      %v210 = vld [vmem:[%s165 + $0x98] sm:$0x1]
      %v211 = vld [vmem:[%s165 + $0x9c] sm:$0xf]
      %v212 = vld [vmem:[%s165 + $0xa0] sm:$0xf]
      %v213 = vld [vmem:[%s165 + $0xa4] sm:$0x1]
      %v214 = vld [vmem:[%s165 + $0xa8] sm:$0xf]
      %v215 = vld [vmem:[%s165 + $0xac] sm:$0xf]
      %v216 = vld [vmem:[%s165 + $0xb0] sm:$0x1]
      %v217 = vld [vmem:[%s165 + $0xb4] sm:$0xf]
      %v218 = vld [vmem:[%s165 + $0xb8] sm:$0xf]
      %v219 = vld [vmem:[%s165 + $0xbc] sm:$0x1]
      %v220 = vld [vmem:[%s165 + $0xc0] sm:$0xf]
      %v221 = vld [vmem:[%s165 + $0xc4] sm:$0xf]
      %v222 = vld [vmem:[%s165 + $0xc8] sm:$0x1]
      %v223 = vld [vmem:[%s165 + $0xcc] sm:$0xf]
      %v224 = vld [vmem:[%s165 + $0xd0] sm:$0xf]
      %v225 = vld [vmem:[%s165 + $0xd4] sm:$0x1]
      %v226 = vunpack.c.l.bf16 %v172
      %v227 = vunpack.c.l.bf16 %v173
      %v228 = vunpack.c.l.bf16 %v174
      %v229 = vunpack.c.l.bf16 %v175
      %v230 = vunpack.c.l.bf16 %v176
      %v231 = vunpack.c.l.bf16 %v177
      %v232 = vunpack.c.l.bf16 %v178
      %v233 = vunpack.c.l.bf16 %v179
      %v234 = vunpack.c.l.bf16 %v180
      %v235 = vunpack.c.l.bf16 %v181
      %v236 = vunpack.c.l.bf16 %v182
      %v237 = vunpack.c.l.bf16 %v183
      %v238 = vunpack.c.l.bf16 %v184
      %v239 = vunpack.c.l.bf16 %v185
      %v240 = vunpack.c.l.bf16 %v186
      %v241 = vunpack.c.l.bf16 %v187
      %v242 = vunpack.c.l.bf16 %v188
      %v243 = vunpack.c.l.bf16 %v189
      %v244 = vunpack.c.l.bf16 %v190
      %v245 = vunpack.c.l.bf16 %v191
      %v246 = vunpack.c.l.bf16 %v192
      %v247 = vunpack.c.l.bf16 %v193
      %v248 = vunpack.c.l.bf16 %v194
      %v249 = vunpack.c.l.bf16 %v195
      %v250 = vunpack.c.l.bf16 %v196
      %v251 = vunpack.c.l.bf16 %v197
      %v252 = vunpack.c.l.bf16 %v198
      %v253 = vunpack.c.l.bf16 %v199
      %v254 = vunpack.c.l.bf16 %v200
      %v255 = vunpack.c.l.bf16 %v201
      %v256 = vunpack.c.l.bf16 %v202
      %v257 = vunpack.c.l.bf16 %v203
      %v258 = vunpack.c.l.bf16 %v204
      %v259 = vunpack.c.l.bf16 %v205
      %v260 = vunpack.c.l.bf16 %v206
      %v261 = vunpack.c.l.bf16 %v207
      %v262 = vunpack.c.l.bf16 %v208
      %v263 = vunpack.c.l.bf16 %v209
      %v264 = vunpack.c.l.bf16 %v210
      %v265 = vunpack.c.l.bf16 %v211
      %v266 = vunpack.c.l.bf16 %v212
      %v267 = vunpack.c.l.bf16 %v213
      %v268 = vunpack.c.l.bf16 %v214
      %v269 = vunpack.c.l.bf16 %v215
      %v270 = vunpack.c.l.bf16 %v216
      %v271 = vunpack.c.l.bf16 %v217
      %v272 = vunpack.c.l.bf16 %v218
      %v273 = vunpack.c.l.bf16 %v219
      %v274 = vunpack.c.l.bf16 %v220
      %v275 = vunpack.c.l.bf16 %v221
      %v276 = vunpack.c.l.bf16 %v222
      %v277 = vunpack.c.l.bf16 %v223
      %v278 = vunpack.c.l.bf16 %v224
      %v279 = vunpack.c.l.bf16 %v225
      %v280 = vld [vmem:[%s1] sm:$0xf]
      %v281 = vld [vmem:[%s1 + $0x4] sm:$0xf]
      %v282 = vld [vmem:[%s1 + $0x8] sm:$0xf]
      %v283 = vld [vmem:[%s1 + $0xc] sm:$0x3]
      %v284 = vpack.c.bf16 %v227, %v226
      %v285 = vpack.c.bf16 %v230, %v229
      %v286 = vpack.c.bf16 %v233, %v232
      %v287 = vpack.c.bf16 %v236, %v235
      %v288 = vpack.c.bf16 %v239, %v238
      %v289 = vpack.c.bf16 %v242, %v241
      %v290 = vpack.c.bf16 %v245, %v244
      %v291 = vpack.c.bf16 %v248, %v247
      %v292 = vpack.c.bf16 %v251, %v250
      %v293 = vpack.c.bf16 %v254, %v253
      %v294 = vpack.c.bf16 %v257, %v256
      %v295 = vpack.c.bf16 %v260, %v259
      %v296 = vpack.c.bf16 %v263, %v262
      %v297 = vpack.c.bf16 %v266, %v265
      %v298 = vpack.c.bf16 %v269, %v268
      %v299 = vpack.c.bf16 %v272, %v271
      %vm348 = vcmask 1046528
      %v349 = vrot.slane %v226, 1
      %v350 = vrot.slane %v227, 1
      %v351 = vsel %vm348, %v349, %v350
      %v352 = vrot.slane %v228, 1
      %v353 = vsel %vm348, %v350, %v352
      %v354 = vrot.slane %v229, 1
      %v355 = vrot.slane %v230, 1
      %v356 = vsel %vm348, %v354, %v355
      %v357 = vrot.slane %v231, 1
      %v358 = vsel %vm348, %v355, %v357
      %v359 = vrot.slane %v232, 1
      %v360 = vrot.slane %v233, 1
      %v361 = vsel %vm348, %v359, %v360
      %v362 = vrot.slane %v234, 1
      %v363 = vsel %vm348, %v360, %v362
      %v364 = vrot.slane %v235, 1
      %v365 = vrot.slane %v236, 1
      %v366 = vsel %vm348, %v364, %v365
      %v367 = vrot.slane %v237, 1
      %v368 = vsel %vm348, %v365, %v367
      %v369 = vrot.slane %v238, 1
      %v370 = vrot.slane %v239, 1
      %v371 = vsel %vm348, %v369, %v370
      %v372 = vrot.slane %v240, 1
      %v373 = vsel %vm348, %v370, %v372
      %v374 = vrot.slane %v241, 1
      %v375 = vrot.slane %v242, 1
      %v376 = vsel %vm348, %v374, %v375
      %v377 = vrot.slane %v243, 1
      %v378 = vsel %vm348, %v375, %v377
      %v379 = vrot.slane %v244, 1
      %v380 = vrot.slane %v245, 1
      %v381 = vsel %vm348, %v379, %v380
      %v382 = vrot.slane %v246, 1
      %v383 = vsel %vm348, %v380, %v382
      %v384 = vrot.slane %v247, 1
      %v385 = vrot.slane %v248, 1
      %v386 = vsel %vm348, %v384, %v385
      %v387 = vrot.slane %v249, 1
      %v388 = vsel %vm348, %v385, %v387
      %v389 = vrot.slane %v250, 1
      %v390 = vrot.slane %v251, 1
      %v391 = vsel %vm348, %v389, %v390
      %v392 = vrot.slane %v252, 1
      %v393 = vsel %vm348, %v390, %v392
      %v394 = vrot.slane %v253, 1
      %v395 = vrot.slane %v254, 1
      %v396 = vsel %vm348, %v394, %v395
      %v397 = vrot.slane %v255, 1
      %v398 = vsel %vm348, %v395, %v397
      %v399 = vrot.slane %v256, 1
      %v400 = vrot.slane %v257, 1
      %v401 = vsel %vm348, %v399, %v400
      %v402 = vrot.slane %v258, 1
      %v403 = vsel %vm348, %v400, %v402
      %v404 = vrot.slane %v259, 1
      %v405 = vrot.slane %v260, 1
      %v406 = vsel %vm348, %v404, %v405
      %v407 = vrot.slane %v261, 1
      %v408 = vsel %vm348, %v405, %v407
      %v409 = vrot.slane %v262, 1
      %v410 = vrot.slane %v263, 1
      %v411 = vsel %vm348, %v409, %v410
      %v412 = vrot.slane %v264, 1
      %v413 = vsel %vm348, %v410, %v412
      %v414 = vrot.slane %v265, 1
      %v415 = vrot.slane %v266, 1
      %v416 = vsel %vm348, %v414, %v415
      %v417 = vrot.slane %v267, 1
      %v418 = vsel %vm348, %v415, %v417
      %v419 = vrot.slane %v268, 1
      %v420 = vrot.slane %v269, 1
      %v421 = vsel %vm348, %v419, %v420
      %v422 = vrot.slane %v270, 1
      %v423 = vsel %vm348, %v420, %v422
      %v424 = vrot.slane %v271, 1
      %v425 = vrot.slane %v272, 1
      %v426 = vsel %vm348, %v424, %v425
      %v427 = vrot.slane %v273, 1
      %v428 = vsel %vm348, %v425, %v427
      %v461 = vpack.c.bf16 %v353, %v351
      %v462 = vpack.c.bf16 %v358, %v356
      %v463 = vpack.c.bf16 %v363, %v361
      %v464 = vpack.c.bf16 %v368, %v366
      %v465 = vpack.c.bf16 %v373, %v371
      %v466 = vpack.c.bf16 %v378, %v376
      %v467 = vpack.c.bf16 %v383, %v381
      %v468 = vpack.c.bf16 %v388, %v386
      %v469 = vpack.c.bf16 %v393, %v391
      %v470 = vpack.c.bf16 %v398, %v396
      %v471 = vpack.c.bf16 %v403, %v401
      %v472 = vpack.c.bf16 %v408, %v406
      %v473 = vpack.c.bf16 %v413, %v411
      %v474 = vpack.c.bf16 %v418, %v416
      %v475 = vpack.c.bf16 %v423, %v421
      %v476 = vpack.c.bf16 %v428, %v426
      %v478 = vunpack.c.l.b16 %v280
      %v479 = vpack.c.b16 %v478, %v478
      %v481 = vshrl.u32 %v479, 16
      %v483 = vrot.slane %v481, 1
      %v484 = vshll.u32 %v479, 16
      %v486 = vrot.slane %v484, 2
      %v487 = vor.u32 %v483, %v486
      %vm488 = vcmask 23552
      %v490 = vsel %vm488, %v461, 0
      %v493 = vsel %vm488, %v462, 0
      %v496 = vsel %vm488, %v463, 0
      %v499 = vsel %vm488, %v464, 0
      %v502 = vsel %vm488, %v465, 0
      %v505 = vsel %vm488, %v466, 0
      %v508 = vsel %vm488, %v467, 0
      %v511 = vsel %vm488, %v468, 0
      %v514 = vsel %vm488, %v469, 0
      %v517 = vsel %vm488, %v470, 0
      %v520 = vsel %vm488, %v471, 0
      %v523 = vsel %vm488, %v472, 0
      %v526 = vsel %vm488, %v473, 0
      %v529 = vsel %vm488, %v474, 0
      %v532 = vsel %vm488, %v475, 0
      %v535 = vsel %vm488, %v476, 0
      %vm537 = vcmask 1040384
      %vm538 = vcmask 1041408
      %v539 = vsel %vm537, 4294967295, 65535
      %v540 = vsel %vm538, %v539, 0
      %v542 = vand.u32 %v487, %v540
      %544 = vmatprep.subr.bf16.mxu0 0
      %545 = vmatpush1.bf16.msra.mxu0 0
      %546 = vmatprep.subr.bf16.mxu0 0
      %547 = vmatpush1.bf16.msra.mxu0 0
      %548 = vmatprep.subr.bf16.mxu0 0
      %549 = vmatpush1.bf16.msra.mxu0 0
      %550 = vmatprep.subr.bf16.mxu0 0
      %551 = vmatpush1.bf16.msra.mxu0 0
      %552 = vmatprep.subr.bf16.mxu0 0
      %553 = vmatpush1.bf16.msra.mxu0 0
      %554 = vmatprep.subr.bf16.mxu0 0
      %555 = vmatpush1.bf16.msra.mxu0 0
      %556 = vmatprep.subr.bf16.mxu0 0
      %557 = vmatpush1.bf16.msra.mxu0 0
      %558 = vmatprep.subr.bf16.mxu0 0
      %559 = vmatpush1.bf16.msra.mxu0 %v542
      %560 = vmatprep.subr.bf16.mxu0 0
      %561 = vmatpush2.bf16.msra.mxu0 0
      %562 = vmatprep.subr.bf16.mxu0 0
      %563 = vmatpush2.bf16.msra.mxu0 0
      %564 = vmatprep.subr.bf16.mxu0 0
      %565 = vmatpush2.bf16.msra.mxu0 0
      %566 = vmatprep.subr.bf16.mxu0 0
      %567 = vmatpush2.bf16.msra.mxu0 0
      %568 = vmatprep.subr.bf16.mxu0 0
      %569 = vmatpush2.bf16.msra.mxu0 0
      %570 = vmatprep.subr.bf16.mxu0 0
      %571 = vmatpush2.bf16.msra.mxu0 0
      %572 = vmatprep.subr.bf16.mxu0 0
      %573 = vmatpush2.bf16.msra.mxu0 0
      %574 = vmatprep.subr.bf16.mxu0 0
      %575 = vmatpush2.bf16.msra.mxu0 0
      %576 = vmatprep.mubr.bf16.mxu0 0
      %577 = vmatmul.mubr.bf16.gmra.mxu0 %v490
      %v578 = vpop.f32.mrf.mxu0
      %v579 = vadd.f32 0.0, %v578
      %v580 = vpop.f32.mrf.mxu0
      %v581 = vpop.f32.mrf.mxu0
      %v582 = vadd.f32 0.0, %v581
      %v583 = vpop.f32.mrf.mxu0
      %584 = vmatprep.mubr.bf16.mxu0 0
      %585 = vmatmul.mubr.bf16.gmra.mxu0 %v493
      %v586 = vpop.f32.mrf.mxu0
      %v587 = vadd.f32 0.0, %v586
      %v588 = vpop.f32.mrf.mxu0
      %v589 = vpop.f32.mrf.mxu0
      %v590 = vadd.f32 0.0, %v589
      %v591 = vpop.f32.mrf.mxu0
      %592 = vmatprep.mubr.bf16.mxu0 0
      %593 = vmatmul.mubr.bf16.gmra.mxu0 %v496
      %v594 = vpop.f32.mrf.mxu0
      %v595 = vadd.f32 0.0, %v594
      %v596 = vpop.f32.mrf.mxu0
      %v597 = vpop.f32.mrf.mxu0
      %v598 = vadd.f32 0.0, %v597
      %v599 = vpop.f32.mrf.mxu0
      %600 = vmatprep.mubr.bf16.mxu0 0
      %601 = vmatmul.mubr.bf16.gmra.mxu0 %v499
      %v602 = vpop.f32.mrf.mxu0
      %v603 = vadd.f32 0.0, %v602
      %v604 = vpop.f32.mrf.mxu0
      %v605 = vpop.f32.mrf.mxu0
      %v606 = vadd.f32 0.0, %v605
      %v607 = vpop.f32.mrf.mxu0
      %608 = vmatprep.mubr.bf16.mxu0 0
      %609 = vmatmul.mubr.bf16.gmra.mxu0 %v502
      %v610 = vpop.f32.mrf.mxu0
      %v611 = vadd.f32 0.0, %v610
      %v612 = vpop.f32.mrf.mxu0
      %v613 = vpop.f32.mrf.mxu0
      %v614 = vadd.f32 0.0, %v613
      %v615 = vpop.f32.mrf.mxu0
      %616 = vmatprep.mubr.bf16.mxu0 0
      %617 = vmatmul.mubr.bf16.gmra.mxu0 %v505
      %v618 = vpop.f32.mrf.mxu0
      %v619 = vadd.f32 0.0, %v618
      %v620 = vpop.f32.mrf.mxu0
      %v621 = vpop.f32.mrf.mxu0
      %v622 = vadd.f32 0.0, %v621
      %v623 = vpop.f32.mrf.mxu0
      %624 = vmatprep.mubr.bf16.mxu0 0
      %625 = vmatmul.mubr.bf16.gmra.mxu0 %v508
      %v626 = vpop.f32.mrf.mxu0
      %v627 = vadd.f32 0.0, %v626
      %v628 = vpop.f32.mrf.mxu0
      %v629 = vpop.f32.mrf.mxu0
      %v630 = vadd.f32 0.0, %v629
      %v631 = vpop.f32.mrf.mxu0
      %632 = vmatprep.mubr.bf16.mxu0 0
      %633 = vmatmul.mubr.bf16.gmra.mxu0 %v511
      %v634 = vpop.f32.mrf.mxu0
      %v635 = vadd.f32 0.0, %v634
      %v636 = vpop.f32.mrf.mxu0
      %v637 = vpop.f32.mrf.mxu0
      %v638 = vadd.f32 0.0, %v637
      %v639 = vpop.f32.mrf.mxu0
      %640 = vmatprep.mubr.bf16.mxu0 0
      %641 = vmatmul.mubr.bf16.gmra.mxu0 %v514
      %v642 = vpop.f32.mrf.mxu0
      %v643 = vadd.f32 0.0, %v642
      %v644 = vpop.f32.mrf.mxu0
      %v645 = vpop.f32.mrf.mxu0
      %v646 = vadd.f32 0.0, %v645
      %v647 = vpop.f32.mrf.mxu0
      %648 = vmatprep.mubr.bf16.mxu0 0
      %649 = vmatmul.mubr.bf16.gmra.mxu0 %v517
      %v650 = vpop.f32.mrf.mxu0
      %v651 = vadd.f32 0.0, %v650
      %v652 = vpop.f32.mrf.mxu0
      %v653 = vpop.f32.mrf.mxu0
      %v654 = vadd.f32 0.0, %v653
      %v655 = vpop.f32.mrf.mxu0
      %656 = vmatprep.mubr.bf16.mxu0 0
      %657 = vmatmul.mubr.bf16.gmra.mxu0 %v520
      %v658 = vpop.f32.mrf.mxu0
      %v659 = vadd.f32 0.0, %v658
      %v660 = vpop.f32.mrf.mxu0
      %v661 = vpop.f32.mrf.mxu0
      %v662 = vadd.f32 0.0, %v661
      %v663 = vpop.f32.mrf.mxu0
      %664 = vmatprep.mubr.bf16.mxu0 0
      %665 = vmatmul.mubr.bf16.gmra.mxu0 %v523
      %v666 = vpop.f32.mrf.mxu0
      %v667 = vadd.f32 0.0, %v666
      %v668 = vpop.f32.mrf.mxu0
      %v669 = vpop.f32.mrf.mxu0
      %v670 = vadd.f32 0.0, %v669
      %v671 = vpop.f32.mrf.mxu0
      %672 = vmatprep.mubr.bf16.mxu0 0
      %673 = vmatmul.mubr.bf16.gmra.mxu0 %v526
      %v674 = vpop.f32.mrf.mxu0
      %v675 = vadd.f32 0.0, %v674
      %v676 = vpop.f32.mrf.mxu0
      %v677 = vpop.f32.mrf.mxu0
      %v678 = vadd.f32 0.0, %v677
      %v679 = vpop.f32.mrf.mxu0
      %680 = vmatprep.mubr.bf16.mxu0 0
      %681 = vmatmul.mubr.bf16.gmra.mxu0 %v529
      %v682 = vpop.f32.mrf.mxu0
      %v683 = vadd.f32 0.0, %v682
      %v684 = vpop.f32.mrf.mxu0
      %v685 = vpop.f32.mrf.mxu0
      %v686 = vadd.f32 0.0, %v685
      %v687 = vpop.f32.mrf.mxu0
      %688 = vmatprep.mubr.bf16.mxu0 0
      %689 = vmatmul.mubr.bf16.gmra.mxu0 %v532
      %v690 = vpop.f32.mrf.mxu0
      %v691 = vadd.f32 0.0, %v690
      %v692 = vpop.f32.mrf.mxu0
      %v693 = vpop.f32.mrf.mxu0
      %v694 = vadd.f32 0.0, %v693
      %v695 = vpop.f32.mrf.mxu0
      %696 = vmatprep.mubr.bf16.mxu0 0
      %697 = vmatmul.mubr.bf16.gmra.mxu0 %v535
      %v698 = vpop.f32.mrf.mxu0
      %v699 = vadd.f32 0.0, %v698
      %v700 = vpop.f32.mrf.mxu0
      %v701 = vpop.f32.mrf.mxu0
      %v702 = vadd.f32 0.0, %v701
      %v703 = vpop.f32.mrf.mxu0
      %704 = vdwg.mxu0
      %v706 = vsel %vm488, %v284, 0
      %v709 = vsel %vm488, %v285, 0
      %v712 = vsel %vm488, %v286, 0
      %v715 = vsel %vm488, %v287, 0
      %v718 = vsel %vm488, %v288, 0
      %v721 = vsel %vm488, %v289, 0
      %v724 = vsel %vm488, %v290, 0
      %v727 = vsel %vm488, %v291, 0
      %v730 = vsel %vm488, %v292, 0
      %v733 = vsel %vm488, %v293, 0
      %v736 = vsel %vm488, %v294, 0
      %v739 = vsel %vm488, %v295, 0
      %v742 = vsel %vm488, %v296, 0
      %v745 = vsel %vm488, %v297, 0
      %v748 = vsel %vm488, %v298, 0
      %v751 = vsel %vm488, %v299, 0
      %v754 = vand.u32 %v280, %v540
      %756 = vmatprep.subr.bf16.mxu0 0
      %757 = vmatpush1.bf16.msra.mxu0 0
      %758 = vmatprep.subr.bf16.mxu0 0
      %759 = vmatpush1.bf16.msra.mxu0 0
      %760 = vmatprep.subr.bf16.mxu0 0
      %761 = vmatpush1.bf16.msra.mxu0 0
      %762 = vmatprep.subr.bf16.mxu0 0
      %763 = vmatpush1.bf16.msra.mxu0 0
      %764 = vmatprep.subr.bf16.mxu0 0
      %765 = vmatpush1.bf16.msra.mxu0 0
      %766 = vmatprep.subr.bf16.mxu0 0
      %767 = vmatpush1.bf16.msra.mxu0 0
      %768 = vmatprep.subr.bf16.mxu0 0
      %769 = vmatpush1.bf16.msra.mxu0 0
      %770 = vmatprep.subr.bf16.mxu0 0
      %771 = vmatpush1.bf16.msra.mxu0 %v754
      %772 = vmatprep.subr.bf16.mxu0 0
      %773 = vmatpush2.bf16.msra.mxu0 0
      %774 = vmatprep.subr.bf16.mxu0 0
      %775 = vmatpush2.bf16.msra.mxu0 0
      %776 = vmatprep.subr.bf16.mxu0 0
      %777 = vmatpush2.bf16.msra.mxu0 0
      %778 = vmatprep.subr.bf16.mxu0 0
      %779 = vmatpush2.bf16.msra.mxu0 0
      %780 = vmatprep.subr.bf16.mxu0 0
      %781 = vmatpush2.bf16.msra.mxu0 0
      %782 = vmatprep.subr.bf16.mxu0 0
      %783 = vmatpush2.bf16.msra.mxu0 0
      %784 = vmatprep.subr.bf16.mxu0 0
      %785 = vmatpush2.bf16.msra.mxu0 0
      %786 = vmatprep.subr.bf16.mxu0 0
      %787 = vmatpush2.bf16.msra.mxu0 0
      %788 = vmatprep.mubr.bf16.mxu0 0
      %789 = vmatmul.mubr.bf16.gmra.mxu0 %v706
      %v790 = vpop.f32.mrf.mxu0
      %v791 = vadd.f32 %v579, %v790
      %v792 = vpop.f32.mrf.mxu0
      %v793 = vpop.f32.mrf.mxu0
      %v794 = vadd.f32 %v582, %v793
      %v795 = vpop.f32.mrf.mxu0
      %796 = vmatprep.mubr.bf16.mxu0 0
      %797 = vmatmul.mubr.bf16.gmra.mxu0 %v709
      %v798 = vpop.f32.mrf.mxu0
      %v799 = vadd.f32 %v587, %v798
      %v800 = vpop.f32.mrf.mxu0
      %v801 = vpop.f32.mrf.mxu0
      %v802 = vadd.f32 %v590, %v801
      %v803 = vpop.f32.mrf.mxu0
      %804 = vmatprep.mubr.bf16.mxu0 0
      %805 = vmatmul.mubr.bf16.gmra.mxu0 %v712
      %v806 = vpop.f32.mrf.mxu0
      %v807 = vadd.f32 %v595, %v806
      %v808 = vpop.f32.mrf.mxu0
      %v809 = vpop.f32.mrf.mxu0
      %v810 = vadd.f32 %v598, %v809
      %v811 = vpop.f32.mrf.mxu0
      %812 = vmatprep.mubr.bf16.mxu0 0
      %813 = vmatmul.mubr.bf16.gmra.mxu0 %v715
      %v814 = vpop.f32.mrf.mxu0
      %v815 = vadd.f32 %v603, %v814
      %v816 = vpop.f32.mrf.mxu0
      %v817 = vpop.f32.mrf.mxu0
      %v818 = vadd.f32 %v606, %v817
      %v819 = vpop.f32.mrf.mxu0
      %820 = vmatprep.mubr.bf16.mxu0 0
      %821 = vmatmul.mubr.bf16.gmra.mxu0 %v718
      %v822 = vpop.f32.mrf.mxu0
      %v823 = vadd.f32 %v611, %v822
      %v824 = vpop.f32.mrf.mxu0
      %v825 = vpop.f32.mrf.mxu0
      %v826 = vadd.f32 %v614, %v825
      %v827 = vpop.f32.mrf.mxu0
      %828 = vmatprep.mubr.bf16.mxu0 0
      %829 = vmatmul.mubr.bf16.gmra.mxu0 %v721
      %v830 = vpop.f32.mrf.mxu0
      %v831 = vadd.f32 %v619, %v830
      %v832 = vpop.f32.mrf.mxu0
      %v833 = vpop.f32.mrf.mxu0
      %v834 = vadd.f32 %v622, %v833
      %v835 = vpop.f32.mrf.mxu0
      %836 = vmatprep.mubr.bf16.mxu0 0
      %837 = vmatmul.mubr.bf16.gmra.mxu0 %v724
      %v838 = vpop.f32.mrf.mxu0
      %v839 = vadd.f32 %v627, %v838
      %v840 = vpop.f32.mrf.mxu0
      %v841 = vpop.f32.mrf.mxu0
      %v842 = vadd.f32 %v630, %v841
      %v843 = vpop.f32.mrf.mxu0
      %844 = vmatprep.mubr.bf16.mxu0 0
      %845 = vmatmul.mubr.bf16.gmra.mxu0 %v727
      %v846 = vpop.f32.mrf.mxu0
      %v847 = vadd.f32 %v635, %v846
      %v848 = vpop.f32.mrf.mxu0
      %v849 = vpop.f32.mrf.mxu0
      %v850 = vadd.f32 %v638, %v849
      %v851 = vpop.f32.mrf.mxu0
      %852 = vmatprep.mubr.bf16.mxu0 0
      %853 = vmatmul.mubr.bf16.gmra.mxu0 %v730
      %v854 = vpop.f32.mrf.mxu0
      %v855 = vadd.f32 %v643, %v854
      %v856 = vpop.f32.mrf.mxu0
      %v857 = vpop.f32.mrf.mxu0
      %v858 = vadd.f32 %v646, %v857
      %v859 = vpop.f32.mrf.mxu0
      %860 = vmatprep.mubr.bf16.mxu0 0
      %861 = vmatmul.mubr.bf16.gmra.mxu0 %v733
      %v862 = vpop.f32.mrf.mxu0
      %v863 = vadd.f32 %v651, %v862
      %v864 = vpop.f32.mrf.mxu0
      %v865 = vpop.f32.mrf.mxu0
      %v866 = vadd.f32 %v654, %v865
      %v867 = vpop.f32.mrf.mxu0
      %868 = vmatprep.mubr.bf16.mxu0 0
      %869 = vmatmul.mubr.bf16.gmra.mxu0 %v736
      %v870 = vpop.f32.mrf.mxu0
      %v871 = vadd.f32 %v659, %v870
      %v872 = vpop.f32.mrf.mxu0
      %v873 = vpop.f32.mrf.mxu0
      %v874 = vadd.f32 %v662, %v873
      %v875 = vpop.f32.mrf.mxu0
      %876 = vmatprep.mubr.bf16.mxu0 0
      %877 = vmatmul.mubr.bf16.gmra.mxu0 %v739
      %v878 = vpop.f32.mrf.mxu0
      %v879 = vadd.f32 %v667, %v878
      %v880 = vpop.f32.mrf.mxu0
      %v881 = vpop.f32.mrf.mxu0
      %v882 = vadd.f32 %v670, %v881
      %v883 = vpop.f32.mrf.mxu0
      %884 = vmatprep.mubr.bf16.mxu0 0
      %885 = vmatmul.mubr.bf16.gmra.mxu0 %v742
      %v886 = vpop.f32.mrf.mxu0
      %v887 = vadd.f32 %v675, %v886
      %v888 = vpop.f32.mrf.mxu0
      %v889 = vpop.f32.mrf.mxu0
      %v890 = vadd.f32 %v678, %v889
      %v891 = vpop.f32.mrf.mxu0
      %892 = vmatprep.mubr.bf16.mxu0 0
      %893 = vmatmul.mubr.bf16.gmra.mxu0 %v745
      %v894 = vpop.f32.mrf.mxu0
      %v895 = vadd.f32 %v683, %v894
      %v896 = vpop.f32.mrf.mxu0
      %v897 = vpop.f32.mrf.mxu0
      %v898 = vadd.f32 %v686, %v897
      %v899 = vpop.f32.mrf.mxu0
      %900 = vmatprep.mubr.bf16.mxu0 0
      %901 = vmatmul.mubr.bf16.gmra.mxu0 %v748
      %v902 = vpop.f32.mrf.mxu0
      %v903 = vadd.f32 %v691, %v902
      %v904 = vpop.f32.mrf.mxu0
      %v905 = vpop.f32.mrf.mxu0
      %v906 = vadd.f32 %v694, %v905
      %v907 = vpop.f32.mrf.mxu0
      %908 = vmatprep.mubr.bf16.mxu0 0
      %909 = vmatmul.mubr.bf16.gmra.mxu0 %v751
      %v910 = vpop.f32.mrf.mxu0
      %v911 = vadd.f32 %v699, %v910
      %v912 = vpop.f32.mrf.mxu0
      %v913 = vpop.f32.mrf.mxu0
      %v914 = vadd.f32 %v702, %v913
      %v915 = vpop.f32.mrf.mxu0
      %916 = vdwg.mxu0
      %vm917 = vcmask 1045504
      %v918 = vrot.slane %v226, 2
      %v919 = vrot.slane %v227, 2
      %v920 = vsel %vm917, %v918, %v919
      %v921 = vrot.slane %v228, 2
      %v922 = vsel %vm917, %v919, %v921
      %v923 = vrot.slane %v229, 2
      %v924 = vrot.slane %v230, 2
      %v925 = vsel %vm917, %v923, %v924
      %v926 = vrot.slane %v231, 2
      %v927 = vsel %vm917, %v924, %v926
      %v928 = vrot.slane %v232, 2
      %v929 = vrot.slane %v233, 2
      %v930 = vsel %vm917, %v928, %v929
      %v931 = vrot.slane %v234, 2
      %v932 = vsel %vm917, %v929, %v931
      %v933 = vrot.slane %v235, 2
      %v934 = vrot.slane %v236, 2
      %v935 = vsel %vm917, %v933, %v934
      %v936 = vrot.slane %v237, 2
      %v937 = vsel %vm917, %v934, %v936
      %v938 = vrot.slane %v238, 2
      %v939 = vrot.slane %v239, 2
      %v940 = vsel %vm917, %v938, %v939
      %v941 = vrot.slane %v240, 2
      %v942 = vsel %vm917, %v939, %v941
      %v943 = vrot.slane %v241, 2
      %v944 = vrot.slane %v242, 2
      %v945 = vsel %vm917, %v943, %v944
      %v946 = vrot.slane %v243, 2
      %v947 = vsel %vm917, %v944, %v946
      %v948 = vrot.slane %v244, 2
      %v949 = vrot.slane %v245, 2
      %v950 = vsel %vm917, %v948, %v949
      %v951 = vrot.slane %v246, 2
      %v952 = vsel %vm917, %v949, %v951
      %v953 = vrot.slane %v247, 2
      %v954 = vrot.slane %v248, 2
      %v955 = vsel %vm917, %v953, %v954
      %v956 = vrot.slane %v249, 2
      %v957 = vsel %vm917, %v954, %v956
      %v958 = vrot.slane %v250, 2
      %v959 = vrot.slane %v251, 2
      %v960 = vsel %vm917, %v958, %v959
      %v961 = vrot.slane %v252, 2
      %v962 = vsel %vm917, %v959, %v961
      %v963 = vrot.slane %v253, 2
      %v964 = vrot.slane %v254, 2
      %v965 = vsel %vm917, %v963, %v964
      %v966 = vrot.slane %v255, 2
      %v967 = vsel %vm917, %v964, %v966
      %v968 = vrot.slane %v256, 2
      %v969 = vrot.slane %v257, 2
      %v970 = vsel %vm917, %v968, %v969
      %v971 = vrot.slane %v258, 2
      %v972 = vsel %vm917, %v969, %v971
      %v973 = vrot.slane %v259, 2
      %v974 = vrot.slane %v260, 2
      %v975 = vsel %vm917, %v973, %v974
      %v976 = vrot.slane %v261, 2
      %v977 = vsel %vm917, %v974, %v976
      %v978 = vrot.slane %v262, 2
      %v979 = vrot.slane %v263, 2
      %v980 = vsel %vm917, %v978, %v979
      %v981 = vrot.slane %v264, 2
      %v982 = vsel %vm917, %v979, %v981
      %v983 = vrot.slane %v265, 2
      %v984 = vrot.slane %v266, 2
      %v985 = vsel %vm917, %v983, %v984
      %v986 = vrot.slane %v267, 2
      %v987 = vsel %vm917, %v984, %v986
      %v988 = vrot.slane %v268, 2
      %v989 = vrot.slane %v269, 2
      %v990 = vsel %vm917, %v988, %v989
      %v991 = vrot.slane %v270, 2
      %v992 = vsel %vm917, %v989, %v991
      %v993 = vrot.slane %v271, 2
      %v994 = vrot.slane %v272, 2
      %v995 = vsel %vm917, %v993, %v994
      %v996 = vrot.slane %v273, 2
      %v997 = vsel %vm917, %v994, %v996
      %v1030 = vpack.c.bf16 %v922, %v920
      %v1031 = vpack.c.bf16 %v927, %v925
      %v1032 = vpack.c.bf16 %v932, %v930
      %v1033 = vpack.c.bf16 %v937, %v935
      %v1034 = vpack.c.bf16 %v942, %v940
      %v1035 = vpack.c.bf16 %v947, %v945
      %v1036 = vpack.c.bf16 %v952, %v950
      %v1037 = vpack.c.bf16 %v957, %v955
      %v1038 = vpack.c.bf16 %v962, %v960
      %v1039 = vpack.c.bf16 %v967, %v965
      %v1040 = vpack.c.bf16 %v972, %v970
      %v1041 = vpack.c.bf16 %v977, %v975
      %v1042 = vpack.c.bf16 %v982, %v980
      %v1043 = vpack.c.bf16 %v987, %v985
      %v1044 = vpack.c.bf16 %v992, %v990
      %v1045 = vpack.c.bf16 %v997, %v995
      %v1047 = vunpack.c.l.b16 %v281
      %v1048 = vpack.c.b16 %v1047, %v478
      %v1049 = vrot.slane %v1048, 3
      %v1051 = vsel %vm488, %v1030, 0
      %v1054 = vsel %vm488, %v1031, 0
      %v1057 = vsel %vm488, %v1032, 0
      %v1060 = vsel %vm488, %v1033, 0
      %v1063 = vsel %vm488, %v1034, 0
      %v1066 = vsel %vm488, %v1035, 0
      %v1069 = vsel %vm488, %v1036, 0
      %v1072 = vsel %vm488, %v1037, 0
      %v1075 = vsel %vm488, %v1038, 0
      %v1078 = vsel %vm488, %v1039, 0
      %v1081 = vsel %vm488, %v1040, 0
      %v1084 = vsel %vm488, %v1041, 0
      %v1087 = vsel %vm488, %v1042, 0
      %v1090 = vsel %vm488, %v1043, 0
      %v1093 = vsel %vm488, %v1044, 0
      %v1096 = vsel %vm488, %v1045, 0
      %v1099 = vand.u32 %v1049, %v540
      %1101 = vmatprep.subr.bf16.mxu0 0
      %1102 = vmatpush1.bf16.msra.mxu0 0
      %1103 = vmatprep.subr.bf16.mxu0 0
      %1104 = vmatpush1.bf16.msra.mxu0 0
      %1105 = vmatprep.subr.bf16.mxu0 0
      %1106 = vmatpush1.bf16.msra.mxu0 0
      %1107 = vmatprep.subr.bf16.mxu0 0
      %1108 = vmatpush1.bf16.msra.mxu0 0
      %1109 = vmatprep.subr.bf16.mxu0 0
      %1110 = vmatpush1.bf16.msra.mxu0 0
      %1111 = vmatprep.subr.bf16.mxu0 0
      %1112 = vmatpush1.bf16.msra.mxu0 0
      %1113 = vmatprep.subr.bf16.mxu0 0
      %1114 = vmatpush1.bf16.msra.mxu0 0
      %1115 = vmatprep.subr.bf16.mxu0 0
      %1116 = vmatpush1.bf16.msra.mxu0 %v1099
      %1117 = vmatprep.subr.bf16.mxu0 0
      %1118 = vmatpush2.bf16.msra.mxu0 0
      %1119 = vmatprep.subr.bf16.mxu0 0
      %1120 = vmatpush2.bf16.msra.mxu0 0
      %1121 = vmatprep.subr.bf16.mxu0 0
      %1122 = vmatpush2.bf16.msra.mxu0 0
      %1123 = vmatprep.subr.bf16.mxu0 0
      %1124 = vmatpush2.bf16.msra.mxu0 0
      %1125 = vmatprep.subr.bf16.mxu0 0
      %1126 = vmatpush2.bf16.msra.mxu0 0
      %1127 = vmatprep.subr.bf16.mxu0 0
      %1128 = vmatpush2.bf16.msra.mxu0 0
      %1129 = vmatprep.subr.bf16.mxu0 0
      %1130 = vmatpush2.bf16.msra.mxu0 0
      %1131 = vmatprep.subr.bf16.mxu0 0
      %1132 = vmatpush2.bf16.msra.mxu0 0
      %1133 = vmatprep.mubr.bf16.mxu0 0
      %1134 = vmatmul.mubr.bf16.gmra.mxu0 %v1051
      %v1135 = vpop.f32.mrf.mxu0
      %v1136 = vadd.f32 0.0, %v1135
      %v1137 = vpop.f32.mrf.mxu0
      %v1138 = vpop.f32.mrf.mxu0
      %v1139 = vadd.f32 0.0, %v1138
      %v1140 = vpop.f32.mrf.mxu0
      %1141 = vmatprep.mubr.bf16.mxu0 0
      %1142 = vmatmul.mubr.bf16.gmra.mxu0 %v1054
      %v1143 = vpop.f32.mrf.mxu0
      %v1144 = vadd.f32 0.0, %v1143
      %v1145 = vpop.f32.mrf.mxu0
      %v1146 = vpop.f32.mrf.mxu0
      %v1147 = vadd.f32 0.0, %v1146
      %v1148 = vpop.f32.mrf.mxu0
      %1149 = vmatprep.mubr.bf16.mxu0 0
      %1150 = vmatmul.mubr.bf16.gmra.mxu0 %v1057
      %v1151 = vpop.f32.mrf.mxu0
      %v1152 = vadd.f32 0.0, %v1151
      %v1153 = vpop.f32.mrf.mxu0
      %v1154 = vpop.f32.mrf.mxu0
      %v1155 = vadd.f32 0.0, %v1154
      %v1156 = vpop.f32.mrf.mxu0
      %1157 = vmatprep.mubr.bf16.mxu0 0
      %1158 = vmatmul.mubr.bf16.gmra.mxu0 %v1060
      %v1159 = vpop.f32.mrf.mxu0
      %v1160 = vadd.f32 0.0, %v1159
      %v1161 = vpop.f32.mrf.mxu0
      %v1162 = vpop.f32.mrf.mxu0
      %v1163 = vadd.f32 0.0, %v1162
      %v1164 = vpop.f32.mrf.mxu0
      %1165 = vmatprep.mubr.bf16.mxu0 0
      %1166 = vmatmul.mubr.bf16.gmra.mxu0 %v1063
      %v1167 = vpop.f32.mrf.mxu0
      %v1168 = vadd.f32 0.0, %v1167
      %v1169 = vpop.f32.mrf.mxu0
      %v1170 = vpop.f32.mrf.mxu0
      %v1171 = vadd.f32 0.0, %v1170
      %v1172 = vpop.f32.mrf.mxu0
      %1173 = vmatprep.mubr.bf16.mxu0 0
      %1174 = vmatmul.mubr.bf16.gmra.mxu0 %v1066
      %v1175 = vpop.f32.mrf.mxu0
      %v1176 = vadd.f32 0.0, %v1175
      %v1177 = vpop.f32.mrf.mxu0
      %v1178 = vpop.f32.mrf.mxu0
      %v1179 = vadd.f32 0.0, %v1178
      %v1180 = vpop.f32.mrf.mxu0
      %1181 = vmatprep.mubr.bf16.mxu0 0
      %1182 = vmatmul.mubr.bf16.gmra.mxu0 %v1069
      %v1183 = vpop.f32.mrf.mxu0
      %v1184 = vadd.f32 0.0, %v1183
      %v1185 = vpop.f32.mrf.mxu0
      %v1186 = vpop.f32.mrf.mxu0
      %v1187 = vadd.f32 0.0, %v1186
      %v1188 = vpop.f32.mrf.mxu0
      %1189 = vmatprep.mubr.bf16.mxu0 0
      %1190 = vmatmul.mubr.bf16.gmra.mxu0 %v1072
      %v1191 = vpop.f32.mrf.mxu0
      %v1192 = vadd.f32 0.0, %v1191
      %v1193 = vpop.f32.mrf.mxu0
      %v1194 = vpop.f32.mrf.mxu0
      %v1195 = vadd.f32 0.0, %v1194
      %v1196 = vpop.f32.mrf.mxu0
      %1197 = vmatprep.mubr.bf16.mxu0 0
      %1198 = vmatmul.mubr.bf16.gmra.mxu0 %v1075
      %v1199 = vpop.f32.mrf.mxu0
      %v1200 = vadd.f32 0.0, %v1199
      %v1201 = vpop.f32.mrf.mxu0
      %v1202 = vpop.f32.mrf.mxu0
      %v1203 = vadd.f32 0.0, %v1202
      %v1204 = vpop.f32.mrf.mxu0
      %1205 = vmatprep.mubr.bf16.mxu0 0
      %1206 = vmatmul.mubr.bf16.gmra.mxu0 %v1078
      %v1207 = vpop.f32.mrf.mxu0
      %v1208 = vadd.f32 0.0, %v1207
      %v1209 = vpop.f32.mrf.mxu0
      %v1210 = vpop.f32.mrf.mxu0
      %v1211 = vadd.f32 0.0, %v1210
      %v1212 = vpop.f32.mrf.mxu0
      %1213 = vmatprep.mubr.bf16.mxu0 0
      %1214 = vmatmul.mubr.bf16.gmra.mxu0 %v1081
      %v1215 = vpop.f32.mrf.mxu0
      %v1216 = vadd.f32 0.0, %v1215
      %v1217 = vpop.f32.mrf.mxu0
      %v1218 = vpop.f32.mrf.mxu0
      %v1219 = vadd.f32 0.0, %v1218
      %v1220 = vpop.f32.mrf.mxu0
      %1221 = vmatprep.mubr.bf16.mxu0 0
      %1222 = vmatmul.mubr.bf16.gmra.mxu0 %v1084
      %v1223 = vpop.f32.mrf.mxu0
      %v1224 = vadd.f32 0.0, %v1223
      %v1225 = vpop.f32.mrf.mxu0
      %v1226 = vpop.f32.mrf.mxu0
      %v1227 = vadd.f32 0.0, %v1226
      %v1228 = vpop.f32.mrf.mxu0
      %1229 = vmatprep.mubr.bf16.mxu0 0
      %1230 = vmatmul.mubr.bf16.gmra.mxu0 %v1087
      %v1231 = vpop.f32.mrf.mxu0
      %v1232 = vadd.f32 0.0, %v1231
      %v1233 = vpop.f32.mrf.mxu0
      %v1234 = vpop.f32.mrf.mxu0
      %v1235 = vadd.f32 0.0, %v1234
      %v1236 = vpop.f32.mrf.mxu0
      %1237 = vmatprep.mubr.bf16.mxu0 0
      %1238 = vmatmul.mubr.bf16.gmra.mxu0 %v1090
      %v1239 = vpop.f32.mrf.mxu0
      %v1240 = vadd.f32 0.0, %v1239
      %v1241 = vpop.f32.mrf.mxu0
      %v1242 = vpop.f32.mrf.mxu0
      %v1243 = vadd.f32 0.0, %v1242
      %v1244 = vpop.f32.mrf.mxu0
      %1245 = vmatprep.mubr.bf16.mxu0 0
      %1246 = vmatmul.mubr.bf16.gmra.mxu0 %v1093
      %v1247 = vpop.f32.mrf.mxu0
      %v1248 = vadd.f32 0.0, %v1247
      %v1249 = vpop.f32.mrf.mxu0
      %v1250 = vpop.f32.mrf.mxu0
      %v1251 = vadd.f32 0.0, %v1250
      %v1252 = vpop.f32.mrf.mxu0
      %1253 = vmatprep.mubr.bf16.mxu0 0
      %1254 = vmatmul.mubr.bf16.gmra.mxu0 %v1096
      %v1255 = vpop.f32.mrf.mxu0
      %v1256 = vadd.f32 0.0, %v1255
      %v1257 = vpop.f32.mrf.mxu0
      %v1258 = vpop.f32.mrf.mxu0
      %v1259 = vadd.f32 0.0, %v1258
      %v1260 = vpop.f32.mrf.mxu0
      %1261 = vdwg.mxu0
      %v1262 = vadd.f32 %v791, %v1136
      %v1263 = vadd.f32 %v794, %v1139
      %v1264 = vadd.f32 %v799, %v1144
      %v1265 = vadd.f32 %v802, %v1147
      %v1266 = vadd.f32 %v807, %v1152
      %v1267 = vadd.f32 %v810, %v1155
      %v1268 = vadd.f32 %v815, %v1160
      %v1269 = vadd.f32 %v818, %v1163
      %v1270 = vadd.f32 %v823, %v1168
      %v1271 = vadd.f32 %v826, %v1171
      %v1272 = vadd.f32 %v831, %v1176
      %v1273 = vadd.f32 %v834, %v1179
      %v1274 = vadd.f32 %v839, %v1184
      %v1275 = vadd.f32 %v842, %v1187
      %v1276 = vadd.f32 %v847, %v1192
      %v1277 = vadd.f32 %v850, %v1195
      %v1278 = vadd.f32 %v855, %v1200
      %v1279 = vadd.f32 %v858, %v1203
      %v1280 = vadd.f32 %v863, %v1208
      %v1281 = vadd.f32 %v866, %v1211
      %v1282 = vadd.f32 %v871, %v1216
      %v1283 = vadd.f32 %v874, %v1219
      %v1284 = vadd.f32 %v879, %v1224
      %v1285 = vadd.f32 %v882, %v1227
      %v1286 = vadd.f32 %v887, %v1232
      %v1287 = vadd.f32 %v890, %v1235
      %v1288 = vadd.f32 %v895, %v1240
      %v1289 = vadd.f32 %v898, %v1243
      %v1290 = vadd.f32 %v903, %v1248
      %v1291 = vadd.f32 %v906, %v1251
      %v1292 = vadd.f32 %v911, %v1256
      %v1293 = vadd.f32 %v914, %v1259
      %v1294 = vpack.c.bf16 %v275, %v274
      %v1295 = vpack.c.b16 %v1047, %v1047
      %v1297 = vshrl.u32 %v1295, 16
      %v1299 = vshll.u32 %v1295, 16
      %v1301 = vrot.slane %v1299, 1
      %v1302 = vor.u32 %v1297, %v1301
      %v1304 = vsel %vm488, %v1294, 0
      %v1307 = vand.u32 %v1302, %v540
      %1309 = vmatprep.subr.bf16.mxu0 0
      %1310 = vmatpush1.bf16.msra.mxu0 0
      %1311 = vmatprep.subr.bf16.mxu0 0
      %1312 = vmatpush1.bf16.msra.mxu0 0
      %1313 = vmatprep.subr.bf16.mxu0 0
      %1314 = vmatpush1.bf16.msra.mxu0 0
      %1315 = vmatprep.subr.bf16.mxu0 0
      %1316 = vmatpush1.bf16.msra.mxu0 0
      %1317 = vmatprep.subr.bf16.mxu0 0
      %1318 = vmatpush1.bf16.msra.mxu0 0
      %1319 = vmatprep.subr.bf16.mxu0 0
      %1320 = vmatpush1.bf16.msra.mxu0 0
      %1321 = vmatprep.subr.bf16.mxu0 0
      %1322 = vmatpush1.bf16.msra.mxu0 0
      %1323 = vmatprep.subr.bf16.mxu0 0
      %1324 = vmatpush1.bf16.msra.mxu0 %v1307
      %1325 = vmatprep.subr.bf16.mxu0 0
      %1326 = vmatpush2.bf16.msra.mxu0 0
      %1327 = vmatprep.subr.bf16.mxu0 0
      %1328 = vmatpush2.bf16.msra.mxu0 0
      %1329 = vmatprep.subr.bf16.mxu0 0
      %1330 = vmatpush2.bf16.msra.mxu0 0
      %1331 = vmatprep.subr.bf16.mxu0 0
      %1332 = vmatpush2.bf16.msra.mxu0 0
      %1333 = vmatprep.subr.bf16.mxu0 0
      %1334 = vmatpush2.bf16.msra.mxu0 0
      %1335 = vmatprep.subr.bf16.mxu0 0
      %1336 = vmatpush2.bf16.msra.mxu0 0
      %1337 = vmatprep.subr.bf16.mxu0 0
      %1338 = vmatpush2.bf16.msra.mxu0 0
      %1339 = vmatprep.subr.bf16.mxu0 0
      %1340 = vmatpush2.bf16.msra.mxu0 0
      %1341 = vmatprep.mubr.bf16.mxu0 0
      %1342 = vmatmul.mubr.bf16.gmra.mxu0 %v709
      %v1343 = vpop.f32.mrf.mxu0
      %v1344 = vadd.f32 0.0, %v1343
      %v1345 = vpop.f32.mrf.mxu0
      %v1346 = vpop.f32.mrf.mxu0
      %v1347 = vadd.f32 0.0, %v1346
      %v1348 = vpop.f32.mrf.mxu0
      %1349 = vmatprep.mubr.bf16.mxu0 0
      %1350 = vmatmul.mubr.bf16.gmra.mxu0 %v712
      %v1351 = vpop.f32.mrf.mxu0
      %v1352 = vadd.f32 0.0, %v1351
      %v1353 = vpop.f32.mrf.mxu0
      %v1354 = vpop.f32.mrf.mxu0
      %v1355 = vadd.f32 0.0, %v1354
      %v1356 = vpop.f32.mrf.mxu0
      %1357 = vmatprep.mubr.bf16.mxu0 0
      %1358 = vmatmul.mubr.bf16.gmra.mxu0 %v715
      %v1359 = vpop.f32.mrf.mxu0
      %v1360 = vadd.f32 0.0, %v1359
      %v1361 = vpop.f32.mrf.mxu0
      %v1362 = vpop.f32.mrf.mxu0
      %v1363 = vadd.f32 0.0, %v1362
      %v1364 = vpop.f32.mrf.mxu0
      %1365 = vmatprep.mubr.bf16.mxu0 0
      %1366 = vmatmul.mubr.bf16.gmra.mxu0 %v718
      %v1367 = vpop.f32.mrf.mxu0
      %v1368 = vadd.f32 0.0, %v1367
      %v1369 = vpop.f32.mrf.mxu0
      %v1370 = vpop.f32.mrf.mxu0
      %v1371 = vadd.f32 0.0, %v1370
      %v1372 = vpop.f32.mrf.mxu0
      %1373 = vmatprep.mubr.bf16.mxu0 0
      %1374 = vmatmul.mubr.bf16.gmra.mxu0 %v721
      %v1375 = vpop.f32.mrf.mxu0
      %v1376 = vadd.f32 0.0, %v1375
      %v1377 = vpop.f32.mrf.mxu0
      %v1378 = vpop.f32.mrf.mxu0
      %v1379 = vadd.f32 0.0, %v1378
      %v1380 = vpop.f32.mrf.mxu0
      %1381 = vmatprep.mubr.bf16.mxu0 0
      %1382 = vmatmul.mubr.bf16.gmra.mxu0 %v724
      %v1383 = vpop.f32.mrf.mxu0
      %v1384 = vadd.f32 0.0, %v1383
      %v1385 = vpop.f32.mrf.mxu0
      %v1386 = vpop.f32.mrf.mxu0
      %v1387 = vadd.f32 0.0, %v1386
      %v1388 = vpop.f32.mrf.mxu0
      %1389 = vmatprep.mubr.bf16.mxu0 0
      %1390 = vmatmul.mubr.bf16.gmra.mxu0 %v727
      %v1391 = vpop.f32.mrf.mxu0
      %v1392 = vadd.f32 0.0, %v1391
      %v1393 = vpop.f32.mrf.mxu0
      %v1394 = vpop.f32.mrf.mxu0
      %v1395 = vadd.f32 0.0, %v1394
      %v1396 = vpop.f32.mrf.mxu0
      %1397 = vmatprep.mubr.bf16.mxu0 0
      %1398 = vmatmul.mubr.bf16.gmra.mxu0 %v730
      %v1399 = vpop.f32.mrf.mxu0
      %v1400 = vadd.f32 0.0, %v1399
      %v1401 = vpop.f32.mrf.mxu0
      %v1402 = vpop.f32.mrf.mxu0
      %v1403 = vadd.f32 0.0, %v1402
      %v1404 = vpop.f32.mrf.mxu0
      %1405 = vmatprep.mubr.bf16.mxu0 0
      %1406 = vmatmul.mubr.bf16.gmra.mxu0 %v733
      %v1407 = vpop.f32.mrf.mxu0
      %v1408 = vadd.f32 0.0, %v1407
      %v1409 = vpop.f32.mrf.mxu0
      %v1410 = vpop.f32.mrf.mxu0
      %v1411 = vadd.f32 0.0, %v1410
      %v1412 = vpop.f32.mrf.mxu0
      %1413 = vmatprep.mubr.bf16.mxu0 0
      %1414 = vmatmul.mubr.bf16.gmra.mxu0 %v736
      %v1415 = vpop.f32.mrf.mxu0
      %v1416 = vadd.f32 0.0, %v1415
      %v1417 = vpop.f32.mrf.mxu0
      %v1418 = vpop.f32.mrf.mxu0
      %v1419 = vadd.f32 0.0, %v1418
      %v1420 = vpop.f32.mrf.mxu0
      %1421 = vmatprep.mubr.bf16.mxu0 0
      %1422 = vmatmul.mubr.bf16.gmra.mxu0 %v739
      %v1423 = vpop.f32.mrf.mxu0
      %v1424 = vadd.f32 0.0, %v1423
      %v1425 = vpop.f32.mrf.mxu0
      %v1426 = vpop.f32.mrf.mxu0
      %v1427 = vadd.f32 0.0, %v1426
      %v1428 = vpop.f32.mrf.mxu0
      %1429 = vmatprep.mubr.bf16.mxu0 0
      %1430 = vmatmul.mubr.bf16.gmra.mxu0 %v742
      %v1431 = vpop.f32.mrf.mxu0
      %v1432 = vadd.f32 0.0, %v1431
      %v1433 = vpop.f32.mrf.mxu0
      %v1434 = vpop.f32.mrf.mxu0
      %v1435 = vadd.f32 0.0, %v1434
      %v1436 = vpop.f32.mrf.mxu0
      %1437 = vmatprep.mubr.bf16.mxu0 0
      %1438 = vmatmul.mubr.bf16.gmra.mxu0 %v745
      %v1439 = vpop.f32.mrf.mxu0
      %v1440 = vadd.f32 0.0, %v1439
      %v1441 = vpop.f32.mrf.mxu0
      %v1442 = vpop.f32.mrf.mxu0
      %v1443 = vadd.f32 0.0, %v1442
      %v1444 = vpop.f32.mrf.mxu0
      %1445 = vmatprep.mubr.bf16.mxu0 0
      %1446 = vmatmul.mubr.bf16.gmra.mxu0 %v748
      %v1447 = vpop.f32.mrf.mxu0
      %v1448 = vadd.f32 0.0, %v1447
      %v1449 = vpop.f32.mrf.mxu0
      %v1450 = vpop.f32.mrf.mxu0
      %v1451 = vadd.f32 0.0, %v1450
      %v1452 = vpop.f32.mrf.mxu0
      %1453 = vmatprep.mubr.bf16.mxu0 0
      %1454 = vmatmul.mubr.bf16.gmra.mxu0 %v751
      %v1455 = vpop.f32.mrf.mxu0
      %v1456 = vadd.f32 0.0, %v1455
      %v1457 = vpop.f32.mrf.mxu0
      %v1458 = vpop.f32.mrf.mxu0
      %v1459 = vadd.f32 0.0, %v1458
      %v1460 = vpop.f32.mrf.mxu0
      %1461 = vmatprep.mubr.bf16.mxu0 0
      %1462 = vmatmul.mubr.bf16.gmra.mxu0 %v1304
      %v1463 = vpop.f32.mrf.mxu0
      %v1464 = vadd.f32 0.0, %v1463
      %v1465 = vpop.f32.mrf.mxu0
      %v1466 = vpop.f32.mrf.mxu0
      %v1467 = vadd.f32 0.0, %v1466
      %v1468 = vpop.f32.mrf.mxu0
      %1469 = vdwg.mxu0
      %v1470 = vadd.f32 %v1262, %v1344
      %v1471 = vadd.f32 %v1263, %v1347
      %v1472 = vadd.f32 %v1264, %v1352
      %v1473 = vadd.f32 %v1265, %v1355
      %v1474 = vadd.f32 %v1266, %v1360
      %v1475 = vadd.f32 %v1267, %v1363
      %v1476 = vadd.f32 %v1268, %v1368
      %v1477 = vadd.f32 %v1269, %v1371
      %v1478 = vadd.f32 %v1270, %v1376
      %v1479 = vadd.f32 %v1271, %v1379
      %v1480 = vadd.f32 %v1272, %v1384
      %v1481 = vadd.f32 %v1273, %v1387
      %v1482 = vadd.f32 %v1274, %v1392
      %v1483 = vadd.f32 %v1275, %v1395
      %v1484 = vadd.f32 %v1276, %v1400
      %v1485 = vadd.f32 %v1277, %v1403
      %v1486 = vadd.f32 %v1278, %v1408
      %v1487 = vadd.f32 %v1279, %v1411
      %v1488 = vadd.f32 %v1280, %v1416
      %v1489 = vadd.f32 %v1281, %v1419
      %v1490 = vadd.f32 %v1282, %v1424
      %v1491 = vadd.f32 %v1283, %v1427
      %v1492 = vadd.f32 %v1284, %v1432
      %v1493 = vadd.f32 %v1285, %v1435
      %v1494 = vadd.f32 %v1286, %v1440
      %v1495 = vadd.f32 %v1287, %v1443
      %v1496 = vadd.f32 %v1288, %v1448
      %v1497 = vadd.f32 %v1289, %v1451
      %v1498 = vadd.f32 %v1290, %v1456
      %v1499 = vadd.f32 %v1291, %v1459
      %v1500 = vadd.f32 %v1292, %v1464
      %v1501 = vadd.f32 %v1293, %v1467
      %v1505 = vrot.slane %v274, 1
      %v1506 = vrot.slane %v275, 1
      %v1507 = vsel %vm348, %v1505, %v1506
      %v1508 = vrot.slane %v276, 1
      %v1509 = vsel %vm348, %v1506, %v1508
      %v1512 = vpack.c.bf16 %v1509, %v1507
      %v1513 = vrot.slane %v1295, 2
      %v1515 = vsel %vm488, %v1512, 0
      %v1518 = vand.u32 %v1513, %v540
      %1520 = vmatprep.subr.bf16.mxu0 0
      %1521 = vmatpush1.bf16.msra.mxu0 0
      %1522 = vmatprep.subr.bf16.mxu0 0
      %1523 = vmatpush1.bf16.msra.mxu0 0
      %1524 = vmatprep.subr.bf16.mxu0 0
      %1525 = vmatpush1.bf16.msra.mxu0 0
      %1526 = vmatprep.subr.bf16.mxu0 0
      %1527 = vmatpush1.bf16.msra.mxu0 0
      %1528 = vmatprep.subr.bf16.mxu0 0
      %1529 = vmatpush1.bf16.msra.mxu0 0
      %1530 = vmatprep.subr.bf16.mxu0 0
      %1531 = vmatpush1.bf16.msra.mxu0 0
      %1532 = vmatprep.subr.bf16.mxu0 0
      %1533 = vmatpush1.bf16.msra.mxu0 0
      %1534 = vmatprep.subr.bf16.mxu0 0
      %1535 = vmatpush1.bf16.msra.mxu0 %v1518
      %1536 = vmatprep.subr.bf16.mxu0 0
      %1537 = vmatpush2.bf16.msra.mxu0 0
      %1538 = vmatprep.subr.bf16.mxu0 0
      %1539 = vmatpush2.bf16.msra.mxu0 0
      %1540 = vmatprep.subr.bf16.mxu0 0
      %1541 = vmatpush2.bf16.msra.mxu0 0
      %1542 = vmatprep.subr.bf16.mxu0 0
      %1543 = vmatpush2.bf16.msra.mxu0 0
      %1544 = vmatprep.subr.bf16.mxu0 0
      %1545 = vmatpush2.bf16.msra.mxu0 0
      %1546 = vmatprep.subr.bf16.mxu0 0
      %1547 = vmatpush2.bf16.msra.mxu0 0
      %1548 = vmatprep.subr.bf16.mxu0 0
      %1549 = vmatpush2.bf16.msra.mxu0 0
      %1550 = vmatprep.subr.bf16.mxu0 0
      %1551 = vmatpush2.bf16.msra.mxu0 0
      %1552 = vmatprep.mubr.bf16.mxu0 0
      %1553 = vmatmul.mubr.bf16.gmra.mxu0 %v493
      %v1554 = vpop.f32.mrf.mxu0
      %v1555 = vadd.f32 0.0, %v1554
      %v1556 = vpop.f32.mrf.mxu0
      %v1557 = vpop.f32.mrf.mxu0
      %v1558 = vadd.f32 0.0, %v1557
      %v1559 = vpop.f32.mrf.mxu0
      %1560 = vmatprep.mubr.bf16.mxu0 0
      %1561 = vmatmul.mubr.bf16.gmra.mxu0 %v496
      %v1562 = vpop.f32.mrf.mxu0
      %v1563 = vadd.f32 0.0, %v1562
      %v1564 = vpop.f32.mrf.mxu0
      %v1565 = vpop.f32.mrf.mxu0
      %v1566 = vadd.f32 0.0, %v1565
      %v1567 = vpop.f32.mrf.mxu0
      %1568 = vmatprep.mubr.bf16.mxu0 0
      %1569 = vmatmul.mubr.bf16.gmra.mxu0 %v499
      %v1570 = vpop.f32.mrf.mxu0
      %v1571 = vadd.f32 0.0, %v1570
      %v1572 = vpop.f32.mrf.mxu0
      %v1573 = vpop.f32.mrf.mxu0
      %v1574 = vadd.f32 0.0, %v1573
      %v1575 = vpop.f32.mrf.mxu0
      %1576 = vmatprep.mubr.bf16.mxu0 0
      %1577 = vmatmul.mubr.bf16.gmra.mxu0 %v502
      %v1578 = vpop.f32.mrf.mxu0
      %v1579 = vadd.f32 0.0, %v1578
      %v1580 = vpop.f32.mrf.mxu0
      %v1581 = vpop.f32.mrf.mxu0
      %v1582 = vadd.f32 0.0, %v1581
      %v1583 = vpop.f32.mrf.mxu0
      %1584 = vmatprep.mubr.bf16.mxu0 0
      %1585 = vmatmul.mubr.bf16.gmra.mxu0 %v505
      %v1586 = vpop.f32.mrf.mxu0
      %v1587 = vadd.f32 0.0, %v1586
      %v1588 = vpop.f32.mrf.mxu0
      %v1589 = vpop.f32.mrf.mxu0
      %v1590 = vadd.f32 0.0, %v1589
      %v1591 = vpop.f32.mrf.mxu0
      %1592 = vmatprep.mubr.bf16.mxu0 0
      %1593 = vmatmul.mubr.bf16.gmra.mxu0 %v508
      %v1594 = vpop.f32.mrf.mxu0
      %v1595 = vadd.f32 0.0, %v1594
      %v1596 = vpop.f32.mrf.mxu0
      %v1597 = vpop.f32.mrf.mxu0
      %v1598 = vadd.f32 0.0, %v1597
      %v1599 = vpop.f32.mrf.mxu0
      %1600 = vmatprep.mubr.bf16.mxu0 0
      %1601 = vmatmul.mubr.bf16.gmra.mxu0 %v511
      %v1602 = vpop.f32.mrf.mxu0
      %v1603 = vadd.f32 0.0, %v1602
      %v1604 = vpop.f32.mrf.mxu0
      %v1605 = vpop.f32.mrf.mxu0
      %v1606 = vadd.f32 0.0, %v1605
      %v1607 = vpop.f32.mrf.mxu0
      %1608 = vmatprep.mubr.bf16.mxu0 0
      %1609 = vmatmul.mubr.bf16.gmra.mxu0 %v514
      %v1610 = vpop.f32.mrf.mxu0
      %v1611 = vadd.f32 0.0, %v1610
      %v1612 = vpop.f32.mrf.mxu0
      %v1613 = vpop.f32.mrf.mxu0
      %v1614 = vadd.f32 0.0, %v1613
      %v1615 = vpop.f32.mrf.mxu0
      %1616 = vmatprep.mubr.bf16.mxu0 0
      %1617 = vmatmul.mubr.bf16.gmra.mxu0 %v517
      %v1618 = vpop.f32.mrf.mxu0
      %v1619 = vadd.f32 0.0, %v1618
      %v1620 = vpop.f32.mrf.mxu0
      %v1621 = vpop.f32.mrf.mxu0
      %v1622 = vadd.f32 0.0, %v1621
      %v1623 = vpop.f32.mrf.mxu0
      %1624 = vmatprep.mubr.bf16.mxu0 0
      %1625 = vmatmul.mubr.bf16.gmra.mxu0 %v520
      %v1626 = vpop.f32.mrf.mxu0
      %v1627 = vadd.f32 0.0, %v1626
      %v1628 = vpop.f32.mrf.mxu0
      %v1629 = vpop.f32.mrf.mxu0
      %v1630 = vadd.f32 0.0, %v1629
      %v1631 = vpop.f32.mrf.mxu0
      %1632 = vmatprep.mubr.bf16.mxu0 0
      %1633 = vmatmul.mubr.bf16.gmra.mxu0 %v523
      %v1634 = vpop.f32.mrf.mxu0
      %v1635 = vadd.f32 0.0, %v1634
      %v1636 = vpop.f32.mrf.mxu0
      %v1637 = vpop.f32.mrf.mxu0
      %v1638 = vadd.f32 0.0, %v1637
      %v1639 = vpop.f32.mrf.mxu0
      %1640 = vmatprep.mubr.bf16.mxu0 0
      %1641 = vmatmul.mubr.bf16.gmra.mxu0 %v526
      %v1642 = vpop.f32.mrf.mxu0
      %v1643 = vadd.f32 0.0, %v1642
      %v1644 = vpop.f32.mrf.mxu0
      %v1645 = vpop.f32.mrf.mxu0
      %v1646 = vadd.f32 0.0, %v1645
      %v1647 = vpop.f32.mrf.mxu0
      %1648 = vmatprep.mubr.bf16.mxu0 0
      %1649 = vmatmul.mubr.bf16.gmra.mxu0 %v529
      %v1650 = vpop.f32.mrf.mxu0
      %v1651 = vadd.f32 0.0, %v1650
      %v1652 = vpop.f32.mrf.mxu0
      %v1653 = vpop.f32.mrf.mxu0
      %v1654 = vadd.f32 0.0, %v1653
      %v1655 = vpop.f32.mrf.mxu0
      %1656 = vmatprep.mubr.bf16.mxu0 0
      %1657 = vmatmul.mubr.bf16.gmra.mxu0 %v532
      %v1658 = vpop.f32.mrf.mxu0
      %v1659 = vadd.f32 0.0, %v1658
      %v1660 = vpop.f32.mrf.mxu0
      %v1661 = vpop.f32.mrf.mxu0
      %v1662 = vadd.f32 0.0, %v1661
      %v1663 = vpop.f32.mrf.mxu0
      %1664 = vmatprep.mubr.bf16.mxu0 0
      %1665 = vmatmul.mubr.bf16.gmra.mxu0 %v535
      %v1666 = vpop.f32.mrf.mxu0
      %v1667 = vadd.f32 0.0, %v1666
      %v1668 = vpop.f32.mrf.mxu0
      %v1669 = vpop.f32.mrf.mxu0
      %v1670 = vadd.f32 0.0, %v1669
      %v1671 = vpop.f32.mrf.mxu0
      %1672 = vmatprep.mubr.bf16.mxu0 0
      %1673 = vmatmul.mubr.bf16.gmra.mxu0 %v1515
      %v1674 = vpop.f32.mrf.mxu0
      %v1675 = vadd.f32 0.0, %v1674
      %v1676 = vpop.f32.mrf.mxu0
      %v1677 = vpop.f32.mrf.mxu0
      %v1678 = vadd.f32 0.0, %v1677
      %v1679 = vpop.f32.mrf.mxu0
      %1680 = vdwg.mxu0
      %v1681 = vadd.f32 %v1470, %v1555
      %v1682 = vadd.f32 %v1471, %v1558
      %v1683 = vadd.f32 %v1472, %v1563
      %v1684 = vadd.f32 %v1473, %v1566
      %v1685 = vadd.f32 %v1474, %v1571
      %v1686 = vadd.f32 %v1475, %v1574
      %v1687 = vadd.f32 %v1476, %v1579
      %v1688 = vadd.f32 %v1477, %v1582
      %v1689 = vadd.f32 %v1478, %v1587
      %v1690 = vadd.f32 %v1479, %v1590
      %v1691 = vadd.f32 %v1480, %v1595
      %v1692 = vadd.f32 %v1481, %v1598
      %v1693 = vadd.f32 %v1482, %v1603
      %v1694 = vadd.f32 %v1483, %v1606
      %v1695 = vadd.f32 %v1484, %v1611
      %v1696 = vadd.f32 %v1485, %v1614
      %v1697 = vadd.f32 %v1486, %v1619
      %v1698 = vadd.f32 %v1487, %v1622
      %v1699 = vadd.f32 %v1488, %v1627
      %v1700 = vadd.f32 %v1489, %v1630
      %v1701 = vadd.f32 %v1490, %v1635
      %v1702 = vadd.f32 %v1491, %v1638
      %v1703 = vadd.f32 %v1492, %v1643
      %v1704 = vadd.f32 %v1493, %v1646
      %v1705 = vadd.f32 %v1494, %v1651
      %v1706 = vadd.f32 %v1495, %v1654
      %v1707 = vadd.f32 %v1496, %v1659
      %v1708 = vadd.f32 %v1497, %v1662
      %v1709 = vadd.f32 %v1498, %v1667
      %v1710 = vadd.f32 %v1499, %v1670
      %v1711 = vadd.f32 %v1500, %v1675
      %v1712 = vadd.f32 %v1501, %v1678
      %v1713 = vrot.slane %v274, 2
      %v1714 = vrot.slane %v275, 2
      %v1715 = vsel %vm917, %v1713, %v1714
      %v1716 = vrot.slane %v276, 2
      %v1717 = vsel %vm917, %v1714, %v1716
      %v1720 = vpack.c.bf16 %v1717, %v1715
      %v1722 = vunpack.c.l.b16 %v282
      %v1723 = vpack.c.b16 %v1722, %v1047
      %v1725 = vshrl.u32 %v1723, 16
      %v1727 = vrot.slane %v1725, 3
      %v1728 = vshll.u32 %v1723, 16
      %v1730 = vrot.slane %v1728, 4
      %v1731 = vor.u32 %v1727, %v1730
      %v1733 = vsel %vm488, %v1720, 0
      %v1736 = vand.u32 %v1731, %v540
      %1738 = vmatprep.subr.bf16.mxu0 0
      %1739 = vmatpush1.bf16.msra.mxu0 0
      %1740 = vmatprep.subr.bf16.mxu0 0
      %1741 = vmatpush1.bf16.msra.mxu0 0
      %1742 = vmatprep.subr.bf16.mxu0 0
      %1743 = vmatpush1.bf16.msra.mxu0 0
      %1744 = vmatprep.subr.bf16.mxu0 0
      %1745 = vmatpush1.bf16.msra.mxu0 0
      %1746 = vmatprep.subr.bf16.mxu0 0
      %1747 = vmatpush1.bf16.msra.mxu0 0
      %1748 = vmatprep.subr.bf16.mxu0 0
      %1749 = vmatpush1.bf16.msra.mxu0 0
      %1750 = vmatprep.subr.bf16.mxu0 0
      %1751 = vmatpush1.bf16.msra.mxu0 0
      %1752 = vmatprep.subr.bf16.mxu0 0
      %1753 = vmatpush1.bf16.msra.mxu0 %v1736
      %1754 = vmatprep.subr.bf16.mxu0 0
      %1755 = vmatpush2.bf16.msra.mxu0 0
      %1756 = vmatprep.subr.bf16.mxu0 0
      %1757 = vmatpush2.bf16.msra.mxu0 0
      %1758 = vmatprep.subr.bf16.mxu0 0
      %1759 = vmatpush2.bf16.msra.mxu0 0
      %1760 = vmatprep.subr.bf16.mxu0 0
      %1761 = vmatpush2.bf16.msra.mxu0 0
      %1762 = vmatprep.subr.bf16.mxu0 0
      %1763 = vmatpush2.bf16.msra.mxu0 0
      %1764 = vmatprep.subr.bf16.mxu0 0
      %1765 = vmatpush2.bf16.msra.mxu0 0
      %1766 = vmatprep.subr.bf16.mxu0 0
      %1767 = vmatpush2.bf16.msra.mxu0 0
      %1768 = vmatprep.subr.bf16.mxu0 0
      %1769 = vmatpush2.bf16.msra.mxu0 0
      %1770 = vmatprep.mubr.bf16.mxu0 0
      %1771 = vmatmul.mubr.bf16.gmra.mxu0 %v1054
      %v1772 = vpop.f32.mrf.mxu0
      %v1773 = vadd.f32 0.0, %v1772
      %v1774 = vpop.f32.mrf.mxu0
      %v1775 = vpop.f32.mrf.mxu0
      %v1776 = vadd.f32 0.0, %v1775
      %v1777 = vpop.f32.mrf.mxu0
      %1778 = vmatprep.mubr.bf16.mxu0 0
      %1779 = vmatmul.mubr.bf16.gmra.mxu0 %v1057
      %v1780 = vpop.f32.mrf.mxu0
      %v1781 = vadd.f32 0.0, %v1780
      %v1782 = vpop.f32.mrf.mxu0
      %v1783 = vpop.f32.mrf.mxu0
      %v1784 = vadd.f32 0.0, %v1783
      %v1785 = vpop.f32.mrf.mxu0
      %1786 = vmatprep.mubr.bf16.mxu0 0
      %1787 = vmatmul.mubr.bf16.gmra.mxu0 %v1060
      %v1788 = vpop.f32.mrf.mxu0
      %v1789 = vadd.f32 0.0, %v1788
      %v1790 = vpop.f32.mrf.mxu0
      %v1791 = vpop.f32.mrf.mxu0
      %v1792 = vadd.f32 0.0, %v1791
      %v1793 = vpop.f32.mrf.mxu0
      %1794 = vmatprep.mubr.bf16.mxu0 0
      %1795 = vmatmul.mubr.bf16.gmra.mxu0 %v1063
      %v1796 = vpop.f32.mrf.mxu0
      %v1797 = vadd.f32 0.0, %v1796
      %v1798 = vpop.f32.mrf.mxu0
      %v1799 = vpop.f32.mrf.mxu0
      %v1800 = vadd.f32 0.0, %v1799
      %v1801 = vpop.f32.mrf.mxu0
      %1802 = vmatprep.mubr.bf16.mxu0 0
      %1803 = vmatmul.mubr.bf16.gmra.mxu0 %v1066
      %v1804 = vpop.f32.mrf.mxu0
      %v1805 = vadd.f32 0.0, %v1804
      %v1806 = vpop.f32.mrf.mxu0
      %v1807 = vpop.f32.mrf.mxu0
      %v1808 = vadd.f32 0.0, %v1807
      %v1809 = vpop.f32.mrf.mxu0
      %1810 = vmatprep.mubr.bf16.mxu0 0
      %1811 = vmatmul.mubr.bf16.gmra.mxu0 %v1069
      %v1812 = vpop.f32.mrf.mxu0
      %v1813 = vadd.f32 0.0, %v1812
      %v1814 = vpop.f32.mrf.mxu0
      %v1815 = vpop.f32.mrf.mxu0
      %v1816 = vadd.f32 0.0, %v1815
      %v1817 = vpop.f32.mrf.mxu0
      %1818 = vmatprep.mubr.bf16.mxu0 0
      %1819 = vmatmul.mubr.bf16.gmra.mxu0 %v1072
      %v1820 = vpop.f32.mrf.mxu0
      %v1821 = vadd.f32 0.0, %v1820
      %v1822 = vpop.f32.mrf.mxu0
      %v1823 = vpop.f32.mrf.mxu0
      %v1824 = vadd.f32 0.0, %v1823
      %v1825 = vpop.f32.mrf.mxu0
      %1826 = vmatprep.mubr.bf16.mxu0 0
      %1827 = vmatmul.mubr.bf16.gmra.mxu0 %v1075
      %v1828 = vpop.f32.mrf.mxu0
      %v1829 = vadd.f32 0.0, %v1828
      %v1830 = vpop.f32.mrf.mxu0
      %v1831 = vpop.f32.mrf.mxu0
      %v1832 = vadd.f32 0.0, %v1831
      %v1833 = vpop.f32.mrf.mxu0
      %1834 = vmatprep.mubr.bf16.mxu0 0
      %1835 = vmatmul.mubr.bf16.gmra.mxu0 %v1078
      %v1836 = vpop.f32.mrf.mxu0
      %v1837 = vadd.f32 0.0, %v1836
      %v1838 = vpop.f32.mrf.mxu0
      %v1839 = vpop.f32.mrf.mxu0
      %v1840 = vadd.f32 0.0, %v1839
      %v1841 = vpop.f32.mrf.mxu0
      %1842 = vmatprep.mubr.bf16.mxu0 0
      %1843 = vmatmul.mubr.bf16.gmra.mxu0 %v1081
      %v1844 = vpop.f32.mrf.mxu0
      %v1845 = vadd.f32 0.0, %v1844
      %v1846 = vpop.f32.mrf.mxu0
      %v1847 = vpop.f32.mrf.mxu0
      %v1848 = vadd.f32 0.0, %v1847
      %v1849 = vpop.f32.mrf.mxu0
      %1850 = vmatprep.mubr.bf16.mxu0 0
      %1851 = vmatmul.mubr.bf16.gmra.mxu0 %v1084
      %v1852 = vpop.f32.mrf.mxu0
      %v1853 = vadd.f32 0.0, %v1852
      %v1854 = vpop.f32.mrf.mxu0
      %v1855 = vpop.f32.mrf.mxu0
      %v1856 = vadd.f32 0.0, %v1855
      %v1857 = vpop.f32.mrf.mxu0
      %1858 = vmatprep.mubr.bf16.mxu0 0
      %1859 = vmatmul.mubr.bf16.gmra.mxu0 %v1087
      %v1860 = vpop.f32.mrf.mxu0
      %v1861 = vadd.f32 0.0, %v1860
      %v1862 = vpop.f32.mrf.mxu0
      %v1863 = vpop.f32.mrf.mxu0
      %v1864 = vadd.f32 0.0, %v1863
      %v1865 = vpop.f32.mrf.mxu0
      %1866 = vmatprep.mubr.bf16.mxu0 0
      %1867 = vmatmul.mubr.bf16.gmra.mxu0 %v1090
      %v1868 = vpop.f32.mrf.mxu0
      %v1869 = vadd.f32 0.0, %v1868
      %v1870 = vpop.f32.mrf.mxu0
      %v1871 = vpop.f32.mrf.mxu0
      %v1872 = vadd.f32 0.0, %v1871
      %v1873 = vpop.f32.mrf.mxu0
      %1874 = vmatprep.mubr.bf16.mxu0 0
      %1875 = vmatmul.mubr.bf16.gmra.mxu0 %v1093
      %v1876 = vpop.f32.mrf.mxu0
      %v1877 = vadd.f32 0.0, %v1876
      %v1878 = vpop.f32.mrf.mxu0
      %v1879 = vpop.f32.mrf.mxu0
      %v1880 = vadd.f32 0.0, %v1879
      %v1881 = vpop.f32.mrf.mxu0
      %1882 = vmatprep.mubr.bf16.mxu0 0
      %1883 = vmatmul.mubr.bf16.gmra.mxu0 %v1096
      %v1884 = vpop.f32.mrf.mxu0
      %v1885 = vadd.f32 0.0, %v1884
      %v1886 = vpop.f32.mrf.mxu0
      %v1887 = vpop.f32.mrf.mxu0
      %v1888 = vadd.f32 0.0, %v1887
      %v1889 = vpop.f32.mrf.mxu0
      %1890 = vmatprep.mubr.bf16.mxu0 0
      %1891 = vmatmul.mubr.bf16.gmra.mxu0 %v1733
      %v1892 = vpop.f32.mrf.mxu0
      %v1893 = vadd.f32 0.0, %v1892
      %v1894 = vpop.f32.mrf.mxu0
      %v1895 = vpop.f32.mrf.mxu0
      %v1896 = vadd.f32 0.0, %v1895
      %v1897 = vpop.f32.mrf.mxu0
      %1898 = vdwg.mxu0
      %v1899 = vadd.f32 %v1681, %v1773
      %v1900 = vadd.f32 %v1682, %v1776
      %v1901 = vadd.f32 %v1683, %v1781
      %v1902 = vadd.f32 %v1684, %v1784
      %v1903 = vadd.f32 %v1685, %v1789
      %v1904 = vadd.f32 %v1686, %v1792
      %v1905 = vadd.f32 %v1687, %v1797
      %v1906 = vadd.f32 %v1688, %v1800
      %v1907 = vadd.f32 %v1689, %v1805
      %v1908 = vadd.f32 %v1690, %v1808
      %v1909 = vadd.f32 %v1691, %v1813
      %v1910 = vadd.f32 %v1692, %v1816
      %v1911 = vadd.f32 %v1693, %v1821
      %v1912 = vadd.f32 %v1694, %v1824
      %v1913 = vadd.f32 %v1695, %v1829
      %v1914 = vadd.f32 %v1696, %v1832
      %v1915 = vadd.f32 %v1697, %v1837
      %v1916 = vadd.f32 %v1698, %v1840
      %v1917 = vadd.f32 %v1699, %v1845
      %v1918 = vadd.f32 %v1700, %v1848
      %v1919 = vadd.f32 %v1701, %v1853
      %v1920 = vadd.f32 %v1702, %v1856
      %v1921 = vadd.f32 %v1703, %v1861
      %v1922 = vadd.f32 %v1704, %v1864
      %v1923 = vadd.f32 %v1705, %v1869
      %v1924 = vadd.f32 %v1706, %v1872
      %v1925 = vadd.f32 %v1707, %v1877
      %v1926 = vadd.f32 %v1708, %v1880
      %v1927 = vadd.f32 %v1709, %v1885
      %v1928 = vadd.f32 %v1710, %v1888
      %v1929 = vadd.f32 %v1711, %v1893
      %v1930 = vadd.f32 %v1712, %v1896
      %v1931 = vpack.c.bf16 %v278, %v277
      %v1932 = vpack.c.b16 %v1722, %v1722
      %v1933 = vrot.slane %v1932, 1
      %v1935 = vsel %vm488, %v1931, 0
      %v1938 = vand.u32 %v1933, %v540
      %1940 = vmatprep.subr.bf16.mxu0 0
      %1941 = vmatpush1.bf16.msra.mxu0 0
      %1942 = vmatprep.subr.bf16.mxu0 0
      %1943 = vmatpush1.bf16.msra.mxu0 0
      %1944 = vmatprep.subr.bf16.mxu0 0
      %1945 = vmatpush1.bf16.msra.mxu0 0
      %1946 = vmatprep.subr.bf16.mxu0 0
      %1947 = vmatpush1.bf16.msra.mxu0 0
      %1948 = vmatprep.subr.bf16.mxu0 0
      %1949 = vmatpush1.bf16.msra.mxu0 0
      %1950 = vmatprep.subr.bf16.mxu0 0
      %1951 = vmatpush1.bf16.msra.mxu0 0
      %1952 = vmatprep.subr.bf16.mxu0 0
      %1953 = vmatpush1.bf16.msra.mxu0 0
      %1954 = vmatprep.subr.bf16.mxu0 0
      %1955 = vmatpush1.bf16.msra.mxu0 %v1938
      %1956 = vmatprep.subr.bf16.mxu0 0
      %1957 = vmatpush2.bf16.msra.mxu0 0
      %1958 = vmatprep.subr.bf16.mxu0 0
      %1959 = vmatpush2.bf16.msra.mxu0 0
      %1960 = vmatprep.subr.bf16.mxu0 0
      %1961 = vmatpush2.bf16.msra.mxu0 0
      %1962 = vmatprep.subr.bf16.mxu0 0
      %1963 = vmatpush2.bf16.msra.mxu0 0
      %1964 = vmatprep.subr.bf16.mxu0 0
      %1965 = vmatpush2.bf16.msra.mxu0 0
      %1966 = vmatprep.subr.bf16.mxu0 0
      %1967 = vmatpush2.bf16.msra.mxu0 0
      %1968 = vmatprep.subr.bf16.mxu0 0
      %1969 = vmatpush2.bf16.msra.mxu0 0
      %1970 = vmatprep.subr.bf16.mxu0 0
      %1971 = vmatpush2.bf16.msra.mxu0 0
      %1972 = vmatprep.mubr.bf16.mxu0 0
      %1973 = vmatmul.mubr.bf16.gmra.mxu0 %v712
      %v1974 = vpop.f32.mrf.mxu0
      %v1975 = vadd.f32 0.0, %v1974
      %v1976 = vpop.f32.mrf.mxu0
      %v1977 = vpop.f32.mrf.mxu0
      %v1978 = vadd.f32 0.0, %v1977
      %v1979 = vpop.f32.mrf.mxu0
      %1980 = vmatprep.mubr.bf16.mxu0 0
      %1981 = vmatmul.mubr.bf16.gmra.mxu0 %v715
      %v1982 = vpop.f32.mrf.mxu0
      %v1983 = vadd.f32 0.0, %v1982
      %v1984 = vpop.f32.mrf.mxu0
      %v1985 = vpop.f32.mrf.mxu0
      %v1986 = vadd.f32 0.0, %v1985
      %v1987 = vpop.f32.mrf.mxu0
      %1988 = vmatprep.mubr.bf16.mxu0 0
      %1989 = vmatmul.mubr.bf16.gmra.mxu0 %v718
      %v1990 = vpop.f32.mrf.mxu0
      %v1991 = vadd.f32 0.0, %v1990
      %v1992 = vpop.f32.mrf.mxu0
      %v1993 = vpop.f32.mrf.mxu0
      %v1994 = vadd.f32 0.0, %v1993
      %v1995 = vpop.f32.mrf.mxu0
      %1996 = vmatprep.mubr.bf16.mxu0 0
      %1997 = vmatmul.mubr.bf16.gmra.mxu0 %v721
      %v1998 = vpop.f32.mrf.mxu0
      %v1999 = vadd.f32 0.0, %v1998
      %v2000 = vpop.f32.mrf.mxu0
      %v2001 = vpop.f32.mrf.mxu0
      %v2002 = vadd.f32 0.0, %v2001
      %v2003 = vpop.f32.mrf.mxu0
      %2004 = vmatprep.mubr.bf16.mxu0 0
      %2005 = vmatmul.mubr.bf16.gmra.mxu0 %v724
      %v2006 = vpop.f32.mrf.mxu0
      %v2007 = vadd.f32 0.0, %v2006
      %v2008 = vpop.f32.mrf.mxu0
      %v2009 = vpop.f32.mrf.mxu0
      %v2010 = vadd.f32 0.0, %v2009
      %v2011 = vpop.f32.mrf.mxu0
      %2012 = vmatprep.mubr.bf16.mxu0 0
      %2013 = vmatmul.mubr.bf16.gmra.mxu0 %v727
      %v2014 = vpop.f32.mrf.mxu0
      %v2015 = vadd.f32 0.0, %v2014
      %v2016 = vpop.f32.mrf.mxu0
      %v2017 = vpop.f32.mrf.mxu0
      %v2018 = vadd.f32 0.0, %v2017
      %v2019 = vpop.f32.mrf.mxu0
      %2020 = vmatprep.mubr.bf16.mxu0 0
      %2021 = vmatmul.mubr.bf16.gmra.mxu0 %v730
      %v2022 = vpop.f32.mrf.mxu0
      %v2023 = vadd.f32 0.0, %v2022
      %v2024 = vpop.f32.mrf.mxu0
      %v2025 = vpop.f32.mrf.mxu0
      %v2026 = vadd.f32 0.0, %v2025
      %v2027 = vpop.f32.mrf.mxu0
      %2028 = vmatprep.mubr.bf16.mxu0 0
      %2029 = vmatmul.mubr.bf16.gmra.mxu0 %v733
      %v2030 = vpop.f32.mrf.mxu0
      %v2031 = vadd.f32 0.0, %v2030
      %v2032 = vpop.f32.mrf.mxu0
      %v2033 = vpop.f32.mrf.mxu0
      %v2034 = vadd.f32 0.0, %v2033
      %v2035 = vpop.f32.mrf.mxu0
      %2036 = vmatprep.mubr.bf16.mxu0 0
      %2037 = vmatmul.mubr.bf16.gmra.mxu0 %v736
      %v2038 = vpop.f32.mrf.mxu0
      %v2039 = vadd.f32 0.0, %v2038
      %v2040 = vpop.f32.mrf.mxu0
      %v2041 = vpop.f32.mrf.mxu0
      %v2042 = vadd.f32 0.0, %v2041
      %v2043 = vpop.f32.mrf.mxu0
      %2044 = vmatprep.mubr.bf16.mxu0 0
      %2045 = vmatmul.mubr.bf16.gmra.mxu0 %v739
      %v2046 = vpop.f32.mrf.mxu0
      %v2047 = vadd.f32 0.0, %v2046
      %v2048 = vpop.f32.mrf.mxu0
      %v2049 = vpop.f32.mrf.mxu0
      %v2050 = vadd.f32 0.0, %v2049
      %v2051 = vpop.f32.mrf.mxu0
      %2052 = vmatprep.mubr.bf16.mxu0 0
      %2053 = vmatmul.mubr.bf16.gmra.mxu0 %v742
      %v2054 = vpop.f32.mrf.mxu0
      %v2055 = vadd.f32 0.0, %v2054
      %v2056 = vpop.f32.mrf.mxu0
      %v2057 = vpop.f32.mrf.mxu0
      %v2058 = vadd.f32 0.0, %v2057
      %v2059 = vpop.f32.mrf.mxu0
      %2060 = vmatprep.mubr.bf16.mxu0 0
      %2061 = vmatmul.mubr.bf16.gmra.mxu0 %v745
      %v2062 = vpop.f32.mrf.mxu0
      %v2063 = vadd.f32 0.0, %v2062
      %v2064 = vpop.f32.mrf.mxu0
      %v2065 = vpop.f32.mrf.mxu0
      %v2066 = vadd.f32 0.0, %v2065
      %v2067 = vpop.f32.mrf.mxu0
      %2068 = vmatprep.mubr.bf16.mxu0 0
      %2069 = vmatmul.mubr.bf16.gmra.mxu0 %v748
      %v2070 = vpop.f32.mrf.mxu0
      %v2071 = vadd.f32 0.0, %v2070
      %v2072 = vpop.f32.mrf.mxu0
      %v2073 = vpop.f32.mrf.mxu0
      %v2074 = vadd.f32 0.0, %v2073
      %v2075 = vpop.f32.mrf.mxu0
      %2076 = vmatprep.mubr.bf16.mxu0 0
      %2077 = vmatmul.mubr.bf16.gmra.mxu0 %v751
      %v2078 = vpop.f32.mrf.mxu0
      %v2079 = vadd.f32 0.0, %v2078
      %v2080 = vpop.f32.mrf.mxu0
      %v2081 = vpop.f32.mrf.mxu0
      %v2082 = vadd.f32 0.0, %v2081
      %v2083 = vpop.f32.mrf.mxu0
      %2084 = vmatprep.mubr.bf16.mxu0 0
      %2085 = vmatmul.mubr.bf16.gmra.mxu0 %v1304
      %v2086 = vpop.f32.mrf.mxu0
      %v2087 = vadd.f32 0.0, %v2086
      %v2088 = vpop.f32.mrf.mxu0
      %v2089 = vpop.f32.mrf.mxu0
      %v2090 = vadd.f32 0.0, %v2089
      %v2091 = vpop.f32.mrf.mxu0
      %2092 = vmatprep.mubr.bf16.mxu0 0
      %2093 = vmatmul.mubr.bf16.gmra.mxu0 %v1935
      %v2094 = vpop.f32.mrf.mxu0
      %v2095 = vadd.f32 0.0, %v2094
      %v2096 = vpop.f32.mrf.mxu0
      %v2097 = vpop.f32.mrf.mxu0
      %v2098 = vadd.f32 0.0, %v2097
      %v2099 = vpop.f32.mrf.mxu0
      %2100 = vdwg.mxu0
      %v2101 = vadd.f32 %v1899, %v1975
      %v2102 = vadd.f32 %v1900, %v1978
      %v2103 = vadd.f32 %v1901, %v1983
      %v2104 = vadd.f32 %v1902, %v1986
      %v2105 = vadd.f32 %v1903, %v1991
      %v2106 = vadd.f32 %v1904, %v1994
      %v2107 = vadd.f32 %v1905, %v1999
      %v2108 = vadd.f32 %v1906, %v2002
      %v2109 = vadd.f32 %v1907, %v2007
      %v2110 = vadd.f32 %v1908, %v2010
      %v2111 = vadd.f32 %v1909, %v2015
      %v2112 = vadd.f32 %v1910, %v2018
      %v2113 = vadd.f32 %v1911, %v2023
      %v2114 = vadd.f32 %v1912, %v2026
      %v2115 = vadd.f32 %v1913, %v2031
      %v2116 = vadd.f32 %v1914, %v2034
      %v2117 = vadd.f32 %v1915, %v2039
      %v2118 = vadd.f32 %v1916, %v2042
      %v2119 = vadd.f32 %v1917, %v2047
      %v2120 = vadd.f32 %v1918, %v2050
      %v2121 = vadd.f32 %v1919, %v2055
      %v2122 = vadd.f32 %v1920, %v2058
      %v2123 = vadd.f32 %v1921, %v2063
      %v2124 = vadd.f32 %v1922, %v2066
      %v2125 = vadd.f32 %v1923, %v2071
      %v2126 = vadd.f32 %v1924, %v2074
      %v2127 = vadd.f32 %v1925, %v2079
      %v2128 = vadd.f32 %v1926, %v2082
      %v2129 = vadd.f32 %v1927, %v2087
      %v2130 = vadd.f32 %v1928, %v2090
      %v2131 = vadd.f32 %v1929, %v2095
      %v2132 = vadd.f32 %v1930, %v2098
      %v2136 = vrot.slane %v277, 1
      %v2137 = vrot.slane %v278, 1
      %v2138 = vsel %vm348, %v2136, %v2137
      %v2139 = vrot.slane %v279, 1
      %v2140 = vsel %vm348, %v2137, %v2139
      %v2143 = vpack.c.bf16 %v2140, %v2138
      %v2145 = vshrl.u32 %v1932, 16
      %v2147 = vrot.slane %v2145, 2
      %v2148 = vshll.u32 %v1932, 16
      %v2150 = vrot.slane %v2148, 3
      %v2151 = vor.u32 %v2147, %v2150
      %v2153 = vsel %vm488, %v2143, 0
      %v2156 = vand.u32 %v2151, %v540
      %2158 = vmatprep.subr.bf16.mxu0 0
      %2159 = vmatpush1.bf16.msra.mxu0 0
      %2160 = vmatprep.subr.bf16.mxu0 0
      %2161 = vmatpush1.bf16.msra.mxu0 0
      %2162 = vmatprep.subr.bf16.mxu0 0
      %2163 = vmatpush1.bf16.msra.mxu0 0
      %2164 = vmatprep.subr.bf16.mxu0 0
      %2165 = vmatpush1.bf16.msra.mxu0 0
      %2166 = vmatprep.subr.bf16.mxu0 0
      %2167 = vmatpush1.bf16.msra.mxu0 0
      %2168 = vmatprep.subr.bf16.mxu0 0
      %2169 = vmatpush1.bf16.msra.mxu0 0
      %2170 = vmatprep.subr.bf16.mxu0 0
      %2171 = vmatpush1.bf16.msra.mxu0 0
      %2172 = vmatprep.subr.bf16.mxu0 0
      %2173 = vmatpush1.bf16.msra.mxu0 %v2156
      %2174 = vmatprep.subr.bf16.mxu0 0
      %2175 = vmatpush2.bf16.msra.mxu0 0
      %2176 = vmatprep.subr.bf16.mxu0 0
      %2177 = vmatpush2.bf16.msra.mxu0 0
      %2178 = vmatprep.subr.bf16.mxu0 0
      %2179 = vmatpush2.bf16.msra.mxu0 0
      %2180 = vmatprep.subr.bf16.mxu0 0
      %2181 = vmatpush2.bf16.msra.mxu0 0
      %2182 = vmatprep.subr.bf16.mxu0 0
      %2183 = vmatpush2.bf16.msra.mxu0 0
      %2184 = vmatprep.subr.bf16.mxu0 0
      %2185 = vmatpush2.bf16.msra.mxu0 0
      %2186 = vmatprep.subr.bf16.mxu0 0
      %2187 = vmatpush2.bf16.msra.mxu0 0
      %2188 = vmatprep.subr.bf16.mxu0 0
      %2189 = vmatpush2.bf16.msra.mxu0 0
      %2190 = vmatprep.mubr.bf16.mxu0 0
      %2191 = vmatmul.mubr.bf16.gmra.mxu0 %v496
      %v2192 = vpop.f32.mrf.mxu0
      %v2193 = vadd.f32 0.0, %v2192
      %v2194 = vpop.f32.mrf.mxu0
      %v2195 = vpop.f32.mrf.mxu0
      %v2196 = vadd.f32 0.0, %v2195
      %v2197 = vpop.f32.mrf.mxu0
      %2198 = vmatprep.mubr.bf16.mxu0 0
      %2199 = vmatmul.mubr.bf16.gmra.mxu0 %v499
      %v2200 = vpop.f32.mrf.mxu0
      %v2201 = vadd.f32 0.0, %v2200
      %v2202 = vpop.f32.mrf.mxu0
      %v2203 = vpop.f32.mrf.mxu0
      %v2204 = vadd.f32 0.0, %v2203
      %v2205 = vpop.f32.mrf.mxu0
      %2206 = vmatprep.mubr.bf16.mxu0 0
      %2207 = vmatmul.mubr.bf16.gmra.mxu0 %v502
      %v2208 = vpop.f32.mrf.mxu0
      %v2209 = vadd.f32 0.0, %v2208
      %v2210 = vpop.f32.mrf.mxu0
      %v2211 = vpop.f32.mrf.mxu0
      %v2212 = vadd.f32 0.0, %v2211
      %v2213 = vpop.f32.mrf.mxu0
      %2214 = vmatprep.mubr.bf16.mxu0 0
      %2215 = vmatmul.mubr.bf16.gmra.mxu0 %v505
      %v2216 = vpop.f32.mrf.mxu0
      %v2217 = vadd.f32 0.0, %v2216
      %v2218 = vpop.f32.mrf.mxu0
      %v2219 = vpop.f32.mrf.mxu0
      %v2220 = vadd.f32 0.0, %v2219
      %v2221 = vpop.f32.mrf.mxu0
      %2222 = vmatprep.mubr.bf16.mxu0 0
      %2223 = vmatmul.mubr.bf16.gmra.mxu0 %v508
      %v2224 = vpop.f32.mrf.mxu0
      %v2225 = vadd.f32 0.0, %v2224
      %v2226 = vpop.f32.mrf.mxu0
      %v2227 = vpop.f32.mrf.mxu0
      %v2228 = vadd.f32 0.0, %v2227
      %v2229 = vpop.f32.mrf.mxu0
      %2230 = vmatprep.mubr.bf16.mxu0 0
      %2231 = vmatmul.mubr.bf16.gmra.mxu0 %v511
      %v2232 = vpop.f32.mrf.mxu0
      %v2233 = vadd.f32 0.0, %v2232
      %v2234 = vpop.f32.mrf.mxu0
      %v2235 = vpop.f32.mrf.mxu0
      %v2236 = vadd.f32 0.0, %v2235
      %v2237 = vpop.f32.mrf.mxu0
      %2238 = vmatprep.mubr.bf16.mxu0 0
      %2239 = vmatmul.mubr.bf16.gmra.mxu0 %v514
      %v2240 = vpop.f32.mrf.mxu0
      %v2241 = vadd.f32 0.0, %v2240
      %v2242 = vpop.f32.mrf.mxu0
      %v2243 = vpop.f32.mrf.mxu0
      %v2244 = vadd.f32 0.0, %v2243
      %v2245 = vpop.f32.mrf.mxu0
      %2246 = vmatprep.mubr.bf16.mxu0 0
      %2247 = vmatmul.mubr.bf16.gmra.mxu0 %v517
      %v2248 = vpop.f32.mrf.mxu0
      %v2249 = vadd.f32 0.0, %v2248
      %v2250 = vpop.f32.mrf.mxu0
      %v2251 = vpop.f32.mrf.mxu0
      %v2252 = vadd.f32 0.0, %v2251
      %v2253 = vpop.f32.mrf.mxu0
      %2254 = vmatprep.mubr.bf16.mxu0 0
      %2255 = vmatmul.mubr.bf16.gmra.mxu0 %v520
      %v2256 = vpop.f32.mrf.mxu0
      %v2257 = vadd.f32 0.0, %v2256
      %v2258 = vpop.f32.mrf.mxu0
      %v2259 = vpop.f32.mrf.mxu0
      %v2260 = vadd.f32 0.0, %v2259
      %v2261 = vpop.f32.mrf.mxu0
      %2262 = vmatprep.mubr.bf16.mxu0 0
      %2263 = vmatmul.mubr.bf16.gmra.mxu0 %v523
      %v2264 = vpop.f32.mrf.mxu0
      %v2265 = vadd.f32 0.0, %v2264
      %v2266 = vpop.f32.mrf.mxu0
      %v2267 = vpop.f32.mrf.mxu0
      %v2268 = vadd.f32 0.0, %v2267
      %v2269 = vpop.f32.mrf.mxu0
      %2270 = vmatprep.mubr.bf16.mxu0 0
      %2271 = vmatmul.mubr.bf16.gmra.mxu0 %v526
      %v2272 = vpop.f32.mrf.mxu0
      %v2273 = vadd.f32 0.0, %v2272
      %v2274 = vpop.f32.mrf.mxu0
      %v2275 = vpop.f32.mrf.mxu0
      %v2276 = vadd.f32 0.0, %v2275
      %v2277 = vpop.f32.mrf.mxu0
      %2278 = vmatprep.mubr.bf16.mxu0 0
      %2279 = vmatmul.mubr.bf16.gmra.mxu0 %v529
      %v2280 = vpop.f32.mrf.mxu0
      %v2281 = vadd.f32 0.0, %v2280
      %v2282 = vpop.f32.mrf.mxu0
      %v2283 = vpop.f32.mrf.mxu0
      %v2284 = vadd.f32 0.0, %v2283
      %v2285 = vpop.f32.mrf.mxu0
      %2286 = vmatprep.mubr.bf16.mxu0 0
      %2287 = vmatmul.mubr.bf16.gmra.mxu0 %v532
      %v2288 = vpop.f32.mrf.mxu0
      %v2289 = vadd.f32 0.0, %v2288
      %v2290 = vpop.f32.mrf.mxu0
      %v2291 = vpop.f32.mrf.mxu0
      %v2292 = vadd.f32 0.0, %v2291
      %v2293 = vpop.f32.mrf.mxu0
      %2294 = vmatprep.mubr.bf16.mxu0 0
      %2295 = vmatmul.mubr.bf16.gmra.mxu0 %v535
      %v2296 = vpop.f32.mrf.mxu0
      %v2297 = vadd.f32 0.0, %v2296
      %v2298 = vpop.f32.mrf.mxu0
      %v2299 = vpop.f32.mrf.mxu0
      %v2300 = vadd.f32 0.0, %v2299
      %v2301 = vpop.f32.mrf.mxu0
      %2302 = vmatprep.mubr.bf16.mxu0 0
      %2303 = vmatmul.mubr.bf16.gmra.mxu0 %v1515
      %v2304 = vpop.f32.mrf.mxu0
      %v2305 = vadd.f32 0.0, %v2304
      %v2306 = vpop.f32.mrf.mxu0
      %v2307 = vpop.f32.mrf.mxu0
      %v2308 = vadd.f32 0.0, %v2307
      %v2309 = vpop.f32.mrf.mxu0
      %2310 = vmatprep.mubr.bf16.mxu0 0
      %2311 = vmatmul.mubr.bf16.gmra.mxu0 %v2153
      %v2312 = vpop.f32.mrf.mxu0
      %v2313 = vadd.f32 0.0, %v2312
      %v2314 = vpop.f32.mrf.mxu0
      %v2315 = vpop.f32.mrf.mxu0
      %v2316 = vadd.f32 0.0, %v2315
      %v2317 = vpop.f32.mrf.mxu0
      %2318 = vdwg.mxu0
      %v2319 = vadd.f32 %v2101, %v2193
      %v2320 = vadd.f32 %v2102, %v2196
      %v2321 = vadd.f32 %v2103, %v2201
      %v2322 = vadd.f32 %v2104, %v2204
      %v2323 = vadd.f32 %v2105, %v2209
      %v2324 = vadd.f32 %v2106, %v2212
      %v2325 = vadd.f32 %v2107, %v2217
      %v2326 = vadd.f32 %v2108, %v2220
      %v2327 = vadd.f32 %v2109, %v2225
      %v2328 = vadd.f32 %v2110, %v2228
      %v2329 = vadd.f32 %v2111, %v2233
      %v2330 = vadd.f32 %v2112, %v2236
      %v2331 = vadd.f32 %v2113, %v2241
      %v2332 = vadd.f32 %v2114, %v2244
      %v2333 = vadd.f32 %v2115, %v2249
      %v2334 = vadd.f32 %v2116, %v2252
      %v2335 = vadd.f32 %v2117, %v2257
      %v2336 = vadd.f32 %v2118, %v2260
      %v2337 = vadd.f32 %v2119, %v2265
      %v2338 = vadd.f32 %v2120, %v2268
      %v2339 = vadd.f32 %v2121, %v2273
      %v2340 = vadd.f32 %v2122, %v2276
      %v2341 = vadd.f32 %v2123, %v2281
      %v2342 = vadd.f32 %v2124, %v2284
      %v2343 = vadd.f32 %v2125, %v2289
      %v2344 = vadd.f32 %v2126, %v2292
      %v2345 = vadd.f32 %v2127, %v2297
      %v2346 = vadd.f32 %v2128, %v2300
      %v2347 = vadd.f32 %v2129, %v2305
      %v2348 = vadd.f32 %v2130, %v2308
      %v2349 = vadd.f32 %v2131, %v2313
      %v2350 = vadd.f32 %v2132, %v2316
      %v2351 = vrot.slane %v277, 2
      %v2352 = vrot.slane %v278, 2
      %v2353 = vsel %vm917, %v2351, %v2352
      %v2354 = vrot.slane %v279, 2
      %v2355 = vsel %vm917, %v2352, %v2354
      %v2358 = vpack.c.bf16 %v2355, %v2353
      %v2360 = vsel %vm488, %v2358, 0
      %v2363 = vand.u32 %v283, %v540
      %2365 = vmatprep.subr.bf16.mxu0 0
      %2366 = vmatpush1.bf16.msra.mxu0 0
      %2367 = vmatprep.subr.bf16.mxu0 0
      %2368 = vmatpush1.bf16.msra.mxu0 0
      %2369 = vmatprep.subr.bf16.mxu0 0
      %2370 = vmatpush1.bf16.msra.mxu0 0
      %2371 = vmatprep.subr.bf16.mxu0 0
      %2372 = vmatpush1.bf16.msra.mxu0 0
      %2373 = vmatprep.subr.bf16.mxu0 0
      %2374 = vmatpush1.bf16.msra.mxu0 0
      %2375 = vmatprep.subr.bf16.mxu0 0
      %2376 = vmatpush1.bf16.msra.mxu0 0
      %2377 = vmatprep.subr.bf16.mxu0 0
      %2378 = vmatpush1.bf16.msra.mxu0 0
      %2379 = vmatprep.subr.bf16.mxu0 0
      %2380 = vmatpush1.bf16.msra.mxu0 %v2363
      %2381 = vmatprep.subr.bf16.mxu0 0
      %2382 = vmatpush2.bf16.msra.mxu0 0
      %2383 = vmatprep.subr.bf16.mxu0 0
      %2384 = vmatpush2.bf16.msra.mxu0 0
      %2385 = vmatprep.subr.bf16.mxu0 0
      %2386 = vmatpush2.bf16.msra.mxu0 0
      %2387 = vmatprep.subr.bf16.mxu0 0
      %2388 = vmatpush2.bf16.msra.mxu0 0
      %2389 = vmatprep.subr.bf16.mxu0 0
      %2390 = vmatpush2.bf16.msra.mxu0 0
      %2391 = vmatprep.subr.bf16.mxu0 0
      %2392 = vmatpush2.bf16.msra.mxu0 0
      %2393 = vmatprep.subr.bf16.mxu0 0
      %2394 = vmatpush2.bf16.msra.mxu0 0
      %2395 = vmatprep.subr.bf16.mxu0 0
      %2396 = vmatpush2.bf16.msra.mxu0 0
      %2397 = vmatprep.mubr.bf16.mxu0 0
      %2398 = vmatmul.mubr.bf16.gmra.mxu0 %v1057
      %v2399 = vpop.f32.mrf.mxu0
      %v2400 = vadd.f32 0.0, %v2399
      %v2401 = vpop.f32.mrf.mxu0
      %v2402 = vpop.f32.mrf.mxu0
      %v2403 = vadd.f32 0.0, %v2402
      %v2404 = vpop.f32.mrf.mxu0
      %2405 = vmatprep.mubr.bf16.mxu0 0
      %2406 = vmatmul.mubr.bf16.gmra.mxu0 %v1060
      %v2407 = vpop.f32.mrf.mxu0
      %v2408 = vadd.f32 0.0, %v2407
      %v2409 = vpop.f32.mrf.mxu0
      %v2410 = vpop.f32.mrf.mxu0
      %v2411 = vadd.f32 0.0, %v2410
      %v2412 = vpop.f32.mrf.mxu0
      %2413 = vmatprep.mubr.bf16.mxu0 0
      %2414 = vmatmul.mubr.bf16.gmra.mxu0 %v1063
      %v2415 = vpop.f32.mrf.mxu0
      %v2416 = vadd.f32 0.0, %v2415
      %v2417 = vpop.f32.mrf.mxu0
      %v2418 = vpop.f32.mrf.mxu0
      %v2419 = vadd.f32 0.0, %v2418
      %v2420 = vpop.f32.mrf.mxu0
      %2421 = vmatprep.mubr.bf16.mxu0 0
      %2422 = vmatmul.mubr.bf16.gmra.mxu0 %v1066
      %v2423 = vpop.f32.mrf.mxu0
      %v2424 = vadd.f32 0.0, %v2423
      %v2425 = vpop.f32.mrf.mxu0
      %v2426 = vpop.f32.mrf.mxu0
      %v2427 = vadd.f32 0.0, %v2426
      %v2428 = vpop.f32.mrf.mxu0
      %2429 = vmatprep.mubr.bf16.mxu0 0
      %2430 = vmatmul.mubr.bf16.gmra.mxu0 %v1069
      %v2431 = vpop.f32.mrf.mxu0
      %v2432 = vadd.f32 0.0, %v2431
      %v2433 = vpop.f32.mrf.mxu0
      %v2434 = vpop.f32.mrf.mxu0
      %v2435 = vadd.f32 0.0, %v2434
      %v2436 = vpop.f32.mrf.mxu0
      %2437 = vmatprep.mubr.bf16.mxu0 0
      %2438 = vmatmul.mubr.bf16.gmra.mxu0 %v1072
      %v2439 = vpop.f32.mrf.mxu0
      %v2440 = vadd.f32 0.0, %v2439
      %v2441 = vpop.f32.mrf.mxu0
      %v2442 = vpop.f32.mrf.mxu0
      %v2443 = vadd.f32 0.0, %v2442
      %v2444 = vpop.f32.mrf.mxu0
      %2445 = vmatprep.mubr.bf16.mxu0 0
      %2446 = vmatmul.mubr.bf16.gmra.mxu0 %v1075
      %v2447 = vpop.f32.mrf.mxu0
      %v2448 = vadd.f32 0.0, %v2447
      %v2449 = vpop.f32.mrf.mxu0
      %v2450 = vpop.f32.mrf.mxu0
      %v2451 = vadd.f32 0.0, %v2450
      %v2452 = vpop.f32.mrf.mxu0
      %2453 = vmatprep.mubr.bf16.mxu0 0
      %2454 = vmatmul.mubr.bf16.gmra.mxu0 %v1078
      %v2455 = vpop.f32.mrf.mxu0
      %v2456 = vadd.f32 0.0, %v2455
      %v2457 = vpop.f32.mrf.mxu0
      %v2458 = vpop.f32.mrf.mxu0
      %v2459 = vadd.f32 0.0, %v2458
      %v2460 = vpop.f32.mrf.mxu0
      %2461 = vmatprep.mubr.bf16.mxu0 0
      %2462 = vmatmul.mubr.bf16.gmra.mxu0 %v1081
      %v2463 = vpop.f32.mrf.mxu0
      %v2464 = vadd.f32 0.0, %v2463
      %v2465 = vpop.f32.mrf.mxu0
      %v2466 = vpop.f32.mrf.mxu0
      %v2467 = vadd.f32 0.0, %v2466
      %v2468 = vpop.f32.mrf.mxu0
      %2469 = vmatprep.mubr.bf16.mxu0 0
      %2470 = vmatmul.mubr.bf16.gmra.mxu0 %v1084
      %v2471 = vpop.f32.mrf.mxu0
      %v2472 = vadd.f32 0.0, %v2471
      %v2473 = vpop.f32.mrf.mxu0
      %v2474 = vpop.f32.mrf.mxu0
      %v2475 = vadd.f32 0.0, %v2474
      %v2476 = vpop.f32.mrf.mxu0
      %2477 = vmatprep.mubr.bf16.mxu0 0
      %2478 = vmatmul.mubr.bf16.gmra.mxu0 %v1087
      %v2479 = vpop.f32.mrf.mxu0
      %v2480 = vadd.f32 0.0, %v2479
      %v2481 = vpop.f32.mrf.mxu0
      %v2482 = vpop.f32.mrf.mxu0
      %v2483 = vadd.f32 0.0, %v2482
      %v2484 = vpop.f32.mrf.mxu0
      %2485 = vmatprep.mubr.bf16.mxu0 0
      %2486 = vmatmul.mubr.bf16.gmra.mxu0 %v1090
      %v2487 = vpop.f32.mrf.mxu0
      %v2488 = vadd.f32 0.0, %v2487
      %v2489 = vpop.f32.mrf.mxu0
      %v2490 = vpop.f32.mrf.mxu0
      %v2491 = vadd.f32 0.0, %v2490
      %v2492 = vpop.f32.mrf.mxu0
      %2493 = vmatprep.mubr.bf16.mxu0 0
      %2494 = vmatmul.mubr.bf16.gmra.mxu0 %v1093
      %v2495 = vpop.f32.mrf.mxu0
      %v2496 = vadd.f32 0.0, %v2495
      %v2497 = vpop.f32.mrf.mxu0
      %v2498 = vpop.f32.mrf.mxu0
      %v2499 = vadd.f32 0.0, %v2498
      %v2500 = vpop.f32.mrf.mxu0
      %2501 = vmatprep.mubr.bf16.mxu0 0
      %2502 = vmatmul.mubr.bf16.gmra.mxu0 %v1096
      %v2503 = vpop.f32.mrf.mxu0
      %v2504 = vadd.f32 0.0, %v2503
      %v2505 = vpop.f32.mrf.mxu0
      %v2506 = vpop.f32.mrf.mxu0
      %v2507 = vadd.f32 0.0, %v2506
      %v2508 = vpop.f32.mrf.mxu0
      %2509 = vmatprep.mubr.bf16.mxu0 0
      %2510 = vmatmul.mubr.bf16.gmra.mxu0 %v1733
      %v2511 = vpop.f32.mrf.mxu0
      %v2512 = vadd.f32 0.0, %v2511
      %v2513 = vpop.f32.mrf.mxu0
      %v2514 = vpop.f32.mrf.mxu0
      %v2515 = vadd.f32 0.0, %v2514
      %v2516 = vpop.f32.mrf.mxu0
      %2517 = vmatprep.mubr.bf16.mxu0 0
      %2518 = vmatmul.mubr.bf16.gmra.mxu0 %v2360
      %v2519 = vpop.f32.mrf.mxu0
      %v2520 = vadd.f32 0.0, %v2519
      %v2521 = vpop.f32.mrf.mxu0
      %v2522 = vpop.f32.mrf.mxu0
      %v2523 = vadd.f32 0.0, %v2522
      %v2524 = vpop.f32.mrf.mxu0
      %2525 = vdwg.mxu0
      %v2526 = vadd.f32 %v2319, %v2400
      %v2527 = vadd.f32 %v2320, %v2403
      %v2528 = vadd.f32 %v2321, %v2408
      %v2529 = vadd.f32 %v2322, %v2411
      %v2530 = vadd.f32 %v2323, %v2416
      %v2531 = vadd.f32 %v2324, %v2419
      %v2532 = vadd.f32 %v2325, %v2424
      %v2533 = vadd.f32 %v2326, %v2427
      %v2534 = vadd.f32 %v2327, %v2432
      %v2535 = vadd.f32 %v2328, %v2435
      %v2536 = vadd.f32 %v2329, %v2440
      %v2537 = vadd.f32 %v2330, %v2443
      %v2538 = vadd.f32 %v2331, %v2448
      %v2539 = vadd.f32 %v2332, %v2451
      %v2540 = vadd.f32 %v2333, %v2456
      %v2541 = vadd.f32 %v2334, %v2459
      %v2542 = vadd.f32 %v2335, %v2464
      %v2543 = vadd.f32 %v2336, %v2467
      %v2544 = vadd.f32 %v2337, %v2472
      %v2545 = vadd.f32 %v2338, %v2475
      %v2546 = vadd.f32 %v2339, %v2480
      %v2547 = vadd.f32 %v2340, %v2483
      %v2548 = vadd.f32 %v2341, %v2488
      %v2549 = vadd.f32 %v2342, %v2491
      %v2550 = vadd.f32 %v2343, %v2496
      %v2551 = vadd.f32 %v2344, %v2499
      %v2552 = vadd.f32 %v2345, %v2504
      %v2553 = vadd.f32 %v2346, %v2507
      %v2554 = vadd.f32 %v2347, %v2512
      %v2555 = vadd.f32 %v2348, %v2515
      %v2556 = vadd.f32 %v2349, %v2520
      %v2557 = vadd.f32 %v2350, %v2523
      %v2558 = vld [vmem:[%s2] sm:$0x1]
      %v2560 = vlaneseq
      %v2561 = vshrl.u32 %v2560, 7
      %v2562 = vsub.s32 0, %v2561
      %v2563 = vrot.slane %v2558, %v2562
      %v2565 = vadd.f32 %v2526, %v2563
      %v2566 = vadd.f32 %v2527, %v2563
      %v2567 = vadd.f32 %v2528, %v2563
      %v2568 = vadd.f32 %v2529, %v2563
      %v2569 = vadd.f32 %v2530, %v2563
      %v2570 = vadd.f32 %v2531, %v2563
      %v2571 = vadd.f32 %v2532, %v2563
      %v2572 = vadd.f32 %v2533, %v2563
      %v2573 = vadd.f32 %v2534, %v2563
      %v2574 = vadd.f32 %v2535, %v2563
      %v2575 = vadd.f32 %v2536, %v2563
      %v2576 = vadd.f32 %v2537, %v2563
      %v2577 = vadd.f32 %v2538, %v2563
      %v2578 = vadd.f32 %v2539, %v2563
      %v2579 = vadd.f32 %v2540, %v2563
      %v2580 = vadd.f32 %v2541, %v2563
      %v2581 = vadd.f32 %v2542, %v2563
      %v2582 = vadd.f32 %v2543, %v2563
      %v2583 = vadd.f32 %v2544, %v2563
      %v2584 = vadd.f32 %v2545, %v2563
      %v2585 = vadd.f32 %v2546, %v2563
      %v2586 = vadd.f32 %v2547, %v2563
      %v2587 = vadd.f32 %v2548, %v2563
      %v2588 = vadd.f32 %v2549, %v2563
      %v2589 = vadd.f32 %v2550, %v2563
      %v2590 = vadd.f32 %v2551, %v2563
      %v2591 = vadd.f32 %v2552, %v2563
      %v2592 = vadd.f32 %v2553, %v2563
      %v2593 = vadd.f32 %v2554, %v2563
      %v2594 = vadd.f32 %v2555, %v2563
      %v2595 = vadd.f32 %v2556, %v2563
      %v2596 = vadd.f32 %v2557, %v2563
      %vm2597 = vcmask 261120
      %2598 = vst.msk [vmem:[#allocation2] sm:$0xff] %vm2597, 0.0
      %2599 = vst.msk [vmem:[#allocation2 + $0x8] sm:$0xff] %vm2597, 0.0
      %vm2600 = vcmask 254976
      %2601 = vst.msk [vmem:[#allocation2 + $0x10] sm:$0x3] %vm2600, 0.0
      %2602 = vst.msk [vmem:[#allocation2 + $0x18] sm:$0xff] %vm2597, 0.0
      %2603 = vst.msk [vmem:[#allocation2 + $0x20] sm:$0xff] %vm2597, 0.0
      %2604 = vst.msk [vmem:[#allocation2 + $0x28] sm:$0x3] %vm2600, 0.0
      %2605 = vst.msk [vmem:[#allocation2 + $0x30] sm:$0xff] %vm2597, 0.0
      %2606 = vst.msk [vmem:[#allocation2 + $0x38] sm:$0xff] %vm2597, 0.0
      %2607 = vst.msk [vmem:[#allocation2 + $0x40] sm:$0x3] %vm2600, 0.0
      %2608 = vst.msk [vmem:[#allocation2 + $0x48] sm:$0xff] %vm2597, 0.0
      %2609 = vst.msk [vmem:[#allocation2 + $0x50] sm:$0xff] %vm2597, 0.0
      %2610 = vst.msk [vmem:[#allocation2 + $0x58] sm:$0x3] %vm2600, 0.0
      %2611 = vst.msk [vmem:[#allocation2 + $0x60] sm:$0xff] %vm2597, 0.0
      %2612 = vst.msk [vmem:[#allocation2 + $0x68] sm:$0xff] %vm2597, 0.0
      %2613 = vst.msk [vmem:[#allocation2 + $0x70] sm:$0x3] %vm2600, 0.0
      %2614 = vst.msk [vmem:[#allocation2 + $0x78] sm:$0xff] %vm2597, 0.0
      %2615 = vst.msk [vmem:[#allocation2 + $0x80] sm:$0xff] %vm2597, 0.0
      %2616 = vst.msk [vmem:[#allocation2 + $0x88] sm:$0x3] %vm2600, 0.0
      %2617 = vst.msk [vmem:[#allocation2 + $0x90] sm:$0xff] %vm2597, 0.0
      %2618 = vst.msk [vmem:[#allocation2 + $0x98] sm:$0xff] %vm2597, 0.0
      %2619 = vst.msk [vmem:[#allocation2 + $0xa0] sm:$0x3] %vm2600, 0.0
      %2620 = vst.msk [vmem:[#allocation2 + $0xa8] sm:$0xff] %vm2597, 0.0
      %2621 = vst.msk [vmem:[#allocation2 + $0xb0] sm:$0xff] %vm2597, 0.0
      %2622 = vst.msk [vmem:[#allocation2 + $0xb8] sm:$0x3] %vm2600, 0.0
      %2623 = vst.msk [vmem:[#allocation2 + $0xc0] sm:$0xff] %vm2597, 0.0
      %2624 = vst.msk [vmem:[#allocation2 + $0xc8] sm:$0xff] %vm2597, 0.0
      %2625 = vst.msk [vmem:[#allocation2 + $0xd0] sm:$0x3] %vm2600, 0.0
      %2626 = vst.msk [vmem:[#allocation2 + $0xd8] sm:$0xff] %vm2597, 0.0
      %2627 = vst.msk [vmem:[#allocation2 + $0xe0] sm:$0xff] %vm2597, 0.0
      %2628 = vst.msk [vmem:[#allocation2 + $0xe8] sm:$0x3] %vm2600, 0.0
      %2629 = vst.msk [vmem:[#allocation2 + $0xf0] sm:$0xff] %vm2597, 0.0
      %2630 = vst.msk [vmem:[#allocation2 + $0xf8] sm:$0xff] %vm2597, 0.0
      %2631 = vst.msk [vmem:[#allocation2 + $0x100] sm:$0x3] %vm2600, 0.0
      %2632 = vst.msk [vmem:[#allocation2 + $0x108] sm:$0xff] %vm2597, 0.0
      %2633 = vst.msk [vmem:[#allocation2 + $0x110] sm:$0xff] %vm2597, 0.0
      %2634 = vst.msk [vmem:[#allocation2 + $0x118] sm:$0x3] %vm2600, 0.0
      %2635 = vst.msk [vmem:[#allocation2 + $0x120] sm:$0xff] %vm2597, 0.0
      %2636 = vst.msk [vmem:[#allocation2 + $0x128] sm:$0xff] %vm2597, 0.0
      %2637 = vst.msk [vmem:[#allocation2 + $0x130] sm:$0x3] %vm2600, 0.0
      %2638 = vst.msk [vmem:[#allocation2 + $0x138] sm:$0xff] %vm2597, 0.0
      %2639 = vst.msk [vmem:[#allocation2 + $0x140] sm:$0xff] %vm2597, 0.0
      %2640 = vst.msk [vmem:[#allocation2 + $0x148] sm:$0x3] %vm2600, 0.0
      %2641 = vst.msk [vmem:[#allocation2 + $0x150] sm:$0xff] %vm2597, 0.0
      %2642 = vst.msk [vmem:[#allocation2 + $0x158] sm:$0xff] %vm2597, 0.0
      %2643 = vst.msk [vmem:[#allocation2 + $0x160] sm:$0x3] %vm2600, 0.0
      %2644 = vst.msk [vmem:[#allocation2 + $0x168] sm:$0xff] %vm2597, 0.0
      %2645 = vst.msk [vmem:[#allocation2 + $0x170] sm:$0xff] %vm2597, 0.0
      %2646 = vst.msk [vmem:[#allocation2 + $0x178] sm:$0x3] %vm2600, 0.0
      %2647 = vst.msk [vmem:[#allocation2 + $0x180] sm:$0xff] %vm2597, 0.0
      %2648 = vst.msk [vmem:[#allocation2 + $0x188] sm:$0xff] %vm2597, 0.0
      %2649 = vst.msk [vmem:[#allocation2 + $0x190] sm:$0x3] %vm2600, 0.0
      %2650 = vst.msk [vmem:[#allocation2 + $0x198] sm:$0xff] %vm2597, 0.0
      %2651 = vst.msk [vmem:[#allocation2 + $0x1a0] sm:$0xff] %vm2597, 0.0
      %2652 = vst.msk [vmem:[#allocation2 + $0x1a8] sm:$0x3] %vm2600, 0.0
      %s2653 = scalar_lea.vmem [#allocation2], 24
      %2654 = vst.msk [vmem:[%s2653 + $0x1] sm:$0xff] %vm2597, %v2565
      %2655 = vst.msk [vmem:[%s2653 + $0x9] sm:$0xff] %vm2597, %v2566
      %2656 = vst.msk [vmem:[%s2653 + $0x19] sm:$0xff] %vm2597, %v2567
      %2657 = vst.msk [vmem:[%s2653 + $0x21] sm:$0xff] %vm2597, %v2568
      %2658 = vst.msk [vmem:[%s2653 + $0x31] sm:$0xff] %vm2597, %v2569
      %2659 = vst.msk [vmem:[%s2653 + $0x39] sm:$0xff] %vm2597, %v2570
      %2660 = vst.msk [vmem:[%s2653 + $0x49] sm:$0xff] %vm2597, %v2571
      %2661 = vst.msk [vmem:[%s2653 + $0x51] sm:$0xff] %vm2597, %v2572
      %2662 = vst.msk [vmem:[%s2653 + $0x61] sm:$0xff] %vm2597, %v2573
      %2663 = vst.msk [vmem:[%s2653 + $0x69] sm:$0xff] %vm2597, %v2574
      %2664 = vst.msk [vmem:[%s2653 + $0x79] sm:$0xff] %vm2597, %v2575
      %2665 = vst.msk [vmem:[%s2653 + $0x81] sm:$0xff] %vm2597, %v2576
      %2666 = vst.msk [vmem:[%s2653 + $0x91] sm:$0xff] %vm2597, %v2577
      %2667 = vst.msk [vmem:[%s2653 + $0x99] sm:$0xff] %vm2597, %v2578
      %2668 = vst.msk [vmem:[%s2653 + $0xa9] sm:$0xff] %vm2597, %v2579
      %2669 = vst.msk [vmem:[%s2653 + $0xb1] sm:$0xff] %vm2597, %v2580
      %2670 = vst.msk [vmem:[%s2653 + $0xc1] sm:$0xff] %vm2597, %v2581
      %2671 = vst.msk [vmem:[%s2653 + $0xc9] sm:$0xff] %vm2597, %v2582
      %2672 = vst.msk [vmem:[%s2653 + $0xd9] sm:$0xff] %vm2597, %v2583
      %2673 = vst.msk [vmem:[%s2653 + $0xe1] sm:$0xff] %vm2597, %v2584
      %2674 = vst.msk [vmem:[%s2653 + $0xf1] sm:$0xff] %vm2597, %v2585
      %2675 = vst.msk [vmem:[%s2653 + $0xf9] sm:$0xff] %vm2597, %v2586
      %2676 = vst.msk [vmem:[%s2653 + $0x109] sm:$0xff] %vm2597, %v2587
      %2677 = vst.msk [vmem:[%s2653 + $0x111] sm:$0xff] %vm2597, %v2588
      %2678 = vst.msk [vmem:[%s2653 + $0x121] sm:$0xff] %vm2597, %v2589
      %2679 = vst.msk [vmem:[%s2653 + $0x129] sm:$0xff] %vm2597, %v2590
      %2680 = vst.msk [vmem:[%s2653 + $0x139] sm:$0xff] %vm2597, %v2591
      %2681 = vst.msk [vmem:[%s2653 + $0x141] sm:$0xff] %vm2597, %v2592
      %2682 = vst.msk [vmem:[%s2653 + $0x151] sm:$0xff] %vm2597, %v2593
      %2683 = vst.msk [vmem:[%s2653 + $0x159] sm:$0xff] %vm2597, %v2594
      %2684 = vst.msk [vmem:[%s2653 + $0x169] sm:$0xff] %vm2597, %v2595
      %2685 = vst.msk [vmem:[%s2653 + $0x171] sm:$0xff] %vm2597, %v2596
      %v2686 = vld [vmem:[#allocation2] sm:$0xff]
      %v2687 = vld [vmem:[#allocation2 + $0x8] sm:$0xff]
      %v2688 = vld [vmem:[#allocation2 + $0x10] sm:$0x3]
      %v2689 = vld [vmem:[#allocation2 + $0x18] sm:$0xff]
      %v2690 = vld [vmem:[#allocation2 + $0x20] sm:$0xff]
      %v2691 = vld [vmem:[#allocation2 + $0x28] sm:$0x3]
      %v2692 = vld [vmem:[#allocation2 + $0x30] sm:$0xff]
      %v2693 = vld [vmem:[#allocation2 + $0x38] sm:$0xff]
      %v2694 = vld [vmem:[#allocation2 + $0x40] sm:$0x3]
      %v2695 = vld [vmem:[#allocation2 + $0x48] sm:$0xff]
      %v2696 = vld [vmem:[#allocation2 + $0x50] sm:$0xff]
      %v2697 = vld [vmem:[#allocation2 + $0x58] sm:$0x3]
      %v2698 = vld [vmem:[#allocation2 + $0x60] sm:$0xff]
      %v2699 = vld [vmem:[#allocation2 + $0x68] sm:$0xff]
      %v2700 = vld [vmem:[#allocation2 + $0x70] sm:$0x3]
      %v2701 = vld [vmem:[#allocation2 + $0x78] sm:$0xff]
      %v2702 = vld [vmem:[#allocation2 + $0x80] sm:$0xff]
      %v2703 = vld [vmem:[#allocation2 + $0x88] sm:$0x3]
      %v2704 = vld [vmem:[#allocation2 + $0x90] sm:$0xff]
      %v2705 = vld [vmem:[#allocation2 + $0x98] sm:$0xff]
      %v2706 = vld [vmem:[#allocation2 + $0xa0] sm:$0x3]
      %v2707 = vld [vmem:[#allocation2 + $0xa8] sm:$0xff]
      %v2708 = vld [vmem:[#allocation2 + $0xb0] sm:$0xff]
      %v2709 = vld [vmem:[#allocation2 + $0xb8] sm:$0x3]
      %v2710 = vld [vmem:[#allocation2 + $0xc0] sm:$0xff]
      %v2711 = vld [vmem:[#allocation2 + $0xc8] sm:$0xff]
      %v2712 = vld [vmem:[#allocation2 + $0xd0] sm:$0x3]
      %v2713 = vld [vmem:[#allocation2 + $0xd8] sm:$0xff]
      %v2714 = vld [vmem:[#allocation2 + $0xe0] sm:$0xff]
      %v2715 = vld [vmem:[#allocation2 + $0xe8] sm:$0x3]
      %v2716 = vld [vmem:[#allocation2 + $0xf0] sm:$0xff]
      %v2717 = vld [vmem:[#allocation2 + $0xf8] sm:$0xff]
      %v2718 = vld [vmem:[#allocation2 + $0x100] sm:$0x3]
      %v2719 = vld [vmem:[#allocation2 + $0x108] sm:$0xff]
      %v2720 = vld [vmem:[#allocation2 + $0x110] sm:$0xff]
      %v2721 = vld [vmem:[#allocation2 + $0x118] sm:$0x3]
      %v2722 = vld [vmem:[#allocation2 + $0x120] sm:$0xff]
      %v2723 = vld [vmem:[#allocation2 + $0x128] sm:$0xff]
      %v2724 = vld [vmem:[#allocation2 + $0x130] sm:$0x3]
      %v2725 = vld [vmem:[#allocation2 + $0x138] sm:$0xff]
      %v2726 = vld [vmem:[#allocation2 + $0x140] sm:$0xff]
      %v2727 = vld [vmem:[#allocation2 + $0x148] sm:$0x3]
      %v2728 = vld [vmem:[#allocation2 + $0x150] sm:$0xff]
      %v2729 = vld [vmem:[#allocation2 + $0x158] sm:$0xff]
      %v2730 = vld [vmem:[#allocation2 + $0x160] sm:$0x3]
      %v2731 = vld [vmem:[#allocation2 + $0x168] sm:$0xff]
      %v2732 = vld [vmem:[#allocation2 + $0x170] sm:$0xff]
      %v2733 = vld [vmem:[#allocation2 + $0x178] sm:$0x3]
      %v2734 = vld [vmem:[#allocation2 + $0x180] sm:$0xff]
      %v2735 = vld [vmem:[#allocation2 + $0x188] sm:$0xff]
      %v2736 = vld [vmem:[#allocation2 + $0x190] sm:$0x3]
      %v2737 = vld [vmem:[#allocation2 + $0x198] sm:$0xff]
      %v2738 = vld [vmem:[#allocation2 + $0x1a0] sm:$0xff]
      %v2739 = vld [vmem:[#allocation2 + $0x1a8] sm:$0x3]
      %v2740 = vpack.c.bf16 %v2687, %v2686
      %v2741 = vpack.c.bf16 %v2688, %v2688
      %v2742 = vpack.c.bf16 %v2690, %v2689
      %v2743 = vpack.c.bf16 %v2691, %v2691
      %v2744 = vpack.c.bf16 %v2693, %v2692
      %v2745 = vpack.c.bf16 %v2694, %v2694
      %v2746 = vpack.c.bf16 %v2696, %v2695
      %v2747 = vpack.c.bf16 %v2697, %v2697
      %v2748 = vpack.c.bf16 %v2699, %v2698
      %v2749 = vpack.c.bf16 %v2700, %v2700
      %v2750 = vpack.c.bf16 %v2702, %v2701
      %v2751 = vpack.c.bf16 %v2703, %v2703
      %v2752 = vpack.c.bf16 %v2705, %v2704
      %v2753 = vpack.c.bf16 %v2706, %v2706
      %v2754 = vpack.c.bf16 %v2708, %v2707
      %v2755 = vpack.c.bf16 %v2709, %v2709
      %v2756 = vpack.c.bf16 %v2711, %v2710
      %v2757 = vpack.c.bf16 %v2712, %v2712
      %v2758 = vpack.c.bf16 %v2714, %v2713
      %v2759 = vpack.c.bf16 %v2715, %v2715
      %v2760 = vpack.c.bf16 %v2717, %v2716
      %v2761 = vpack.c.bf16 %v2718, %v2718
      %v2762 = vpack.c.bf16 %v2720, %v2719
      %v2763 = vpack.c.bf16 %v2721, %v2721
      %v2764 = vpack.c.bf16 %v2723, %v2722
      %v2765 = vpack.c.bf16 %v2724, %v2724
      %v2766 = vpack.c.bf16 %v2726, %v2725
      %v2767 = vpack.c.bf16 %v2727, %v2727
      %v2768 = vpack.c.bf16 %v2729, %v2728
      %v2769 = vpack.c.bf16 %v2730, %v2730
      %v2770 = vpack.c.bf16 %v2732, %v2731
      %v2771 = vpack.c.bf16 %v2733, %v2733
      %v2772 = vpack.c.bf16 %v2735, %v2734
      %v2773 = vpack.c.bf16 %v2736, %v2736
      %v2774 = vpack.c.bf16 %v2738, %v2737
      %v2775 = vpack.c.bf16 %v2739, %v2739
      %v2812 = vunpack.c.l.b16 %v2740
      %v2813 = vunpack.c.h.b16 %v2740
      %v2814 = vunpack.c.l.b16 %v2741
      %v2815 = vunpack.c.l.b16 %v2742
      %v2816 = vunpack.c.h.b16 %v2742
      %v2817 = vunpack.c.l.b16 %v2743
      %v2818 = vunpack.c.l.b16 %v2744
      %v2819 = vunpack.c.h.b16 %v2744
      %v2820 = vunpack.c.l.b16 %v2745
      %v2821 = vunpack.c.l.b16 %v2746
      %v2822 = vunpack.c.h.b16 %v2746
      %v2823 = vunpack.c.l.b16 %v2747
      %v2824 = vunpack.c.l.b16 %v2748
      %v2825 = vunpack.c.h.b16 %v2748
      %v2826 = vunpack.c.l.b16 %v2749
      %v2827 = vunpack.c.l.b16 %v2750
      %v2828 = vunpack.c.h.b16 %v2750
      %v2829 = vunpack.c.l.b16 %v2751
      %v2830 = vunpack.c.l.b16 %v2752
      %v2831 = vunpack.c.h.b16 %v2752
      %v2832 = vunpack.c.l.b16 %v2753
      %v2833 = vunpack.c.l.b16 %v2754
      %v2834 = vunpack.c.h.b16 %v2754
      %v2835 = vunpack.c.l.b16 %v2755
      %v2836 = vunpack.c.l.b16 %v2756
      %v2837 = vunpack.c.h.b16 %v2756
      %v2838 = vunpack.c.l.b16 %v2757
      %v2839 = vunpack.c.l.b16 %v2758
      %v2840 = vunpack.c.h.b16 %v2758
      %v2841 = vunpack.c.l.b16 %v2759
      %v2842 = vunpack.c.l.b16 %v2760
      %v2843 = vunpack.c.h.b16 %v2760
      %v2844 = vunpack.c.l.b16 %v2761
      %v2845 = vunpack.c.l.b16 %v2762
      %v2846 = vunpack.c.h.b16 %v2762
      %v2847 = vunpack.c.l.b16 %v2763
      %v2848 = vunpack.c.l.b16 %v2764
      %v2849 = vunpack.c.h.b16 %v2764
      %v2850 = vunpack.c.l.b16 %v2765
      %v2851 = vunpack.c.l.b16 %v2766
      %v2852 = vunpack.c.h.b16 %v2766
      %v2853 = vunpack.c.l.b16 %v2767
      %v2854 = vunpack.c.l.b16 %v2768
      %v2855 = vunpack.c.h.b16 %v2768
      %v2856 = vunpack.c.l.b16 %v2769
      %v2857 = vunpack.c.l.b16 %v2770
      %v2858 = vunpack.c.h.b16 %v2770
      %v2859 = vunpack.c.l.b16 %v2771
      %v2860 = vunpack.c.l.b16 %v2772
      %v2861 = vunpack.c.h.b16 %v2772
      %v2862 = vunpack.c.l.b16 %v2773
      %v2863 = vunpack.c.l.b16 %v2774
      %v2864 = vunpack.c.h.b16 %v2774
      %v2865 = vunpack.c.l.b16 %v2775
      %v2866 = vpack.c.b16 %v2812, %v2812
      %v2867 = vpack.c.b16 %v2813, %v2813
      %v2868 = vpack.c.b16 %v2814, %v2814
      %v2869 = vpack.c.b16 %v2815, %v2815
      %v2870 = vpack.c.b16 %v2816, %v2816
      %v2871 = vpack.c.b16 %v2817, %v2817
      %v2872 = vpack.c.b16 %v2818, %v2818
      %v2873 = vpack.c.b16 %v2819, %v2819
      %v2874 = vpack.c.b16 %v2820, %v2820
      %v2875 = vpack.c.b16 %v2821, %v2821
      %v2876 = vpack.c.b16 %v2822, %v2822
      %v2877 = vpack.c.b16 %v2823, %v2823
      %v2878 = vpack.c.b16 %v2824, %v2824
      %v2879 = vpack.c.b16 %v2825, %v2825
      %v2880 = vpack.c.b16 %v2826, %v2826
      %v2881 = vpack.c.b16 %v2827, %v2827
      %v2882 = vpack.c.b16 %v2828, %v2828
      %v2883 = vpack.c.b16 %v2829, %v2829
      %v2884 = vpack.c.b16 %v2830, %v2830
      %v2885 = vpack.c.b16 %v2831, %v2831
      %v2886 = vpack.c.b16 %v2832, %v2832
      %v2887 = vpack.c.b16 %v2833, %v2833
      %v2888 = vpack.c.b16 %v2834, %v2834
      %v2889 = vpack.c.b16 %v2835, %v2835
      %v2890 = vpack.c.b16 %v2836, %v2836
      %v2891 = vpack.c.b16 %v2837, %v2837
      %v2892 = vpack.c.b16 %v2838, %v2838
      %v2893 = vpack.c.b16 %v2839, %v2839
      %v2894 = vpack.c.b16 %v2840, %v2840
      %v2895 = vpack.c.b16 %v2841, %v2841
      %v2896 = vpack.c.b16 %v2842, %v2842
      %v2897 = vpack.c.b16 %v2843, %v2843
      %v2898 = vpack.c.b16 %v2844, %v2844
      %v2899 = vpack.c.b16 %v2845, %v2845
      %v2900 = vpack.c.b16 %v2846, %v2846
      %v2901 = vpack.c.b16 %v2847, %v2847
      %v2902 = vpack.c.b16 %v2848, %v2848
      %v2903 = vpack.c.b16 %v2849, %v2849
      %v2904 = vpack.c.b16 %v2850, %v2850
      %v2905 = vpack.c.b16 %v2851, %v2851
      %v2906 = vpack.c.b16 %v2852, %v2852
      %v2907 = vpack.c.b16 %v2853, %v2853
      %v2908 = vpack.c.b16 %v2854, %v2854
      %v2909 = vpack.c.b16 %v2855, %v2855
      %v2910 = vpack.c.b16 %v2856, %v2856
      %v2911 = vpack.c.b16 %v2857, %v2857
      %v2912 = vpack.c.b16 %v2858, %v2858
      %v2913 = vpack.c.b16 %v2859, %v2859
      %v2914 = vpack.c.b16 %v2860, %v2860
      %v2915 = vpack.c.b16 %v2861, %v2861
      %v2916 = vpack.c.b16 %v2862, %v2862
      %v2917 = vpack.c.b16 %v2863, %v2863
      %v2918 = vpack.c.b16 %v2864, %v2864
      %v2919 = vpack.c.b16 %v2865, %v2865
      %vm2974 = vcmask 257024
      %2975 = vst.msk [vmem:[%s170] sm:$0xf] %vm2974, %v2866
      %2976 = vst.msk [vmem:[%s170 + $0x4] sm:$0xf] %vm2974, %v2867
      %vm2977 = vcmask 253952
      %2978 = vst.msk [vmem:[%s170 + $0x8] sm:$0x1] %vm2977, %v2868
      %2979 = vst.msk [vmem:[%s170 + $0xc] sm:$0xf] %vm2974, %v2869
      %2980 = vst.msk [vmem:[%s170 + $0x10] sm:$0xf] %vm2974, %v2870
      %2981 = vst.msk [vmem:[%s170 + $0x14] sm:$0x1] %vm2977, %v2871
      %2982 = vst.msk [vmem:[%s170 + $0x18] sm:$0xf] %vm2974, %v2872
      %2983 = vst.msk [vmem:[%s170 + $0x1c] sm:$0xf] %vm2974, %v2873
      %2984 = vst.msk [vmem:[%s170 + $0x20] sm:$0x1] %vm2977, %v2874
      %2985 = vst.msk [vmem:[%s170 + $0x24] sm:$0xf] %vm2974, %v2875
      %2986 = vst.msk [vmem:[%s170 + $0x28] sm:$0xf] %vm2974, %v2876
      %2987 = vst.msk [vmem:[%s170 + $0x2c] sm:$0x1] %vm2977, %v2877
      %2988 = vst.msk [vmem:[%s170 + $0x30] sm:$0xf] %vm2974, %v2878
      %2989 = vst.msk [vmem:[%s170 + $0x34] sm:$0xf] %vm2974, %v2879
      %2990 = vst.msk [vmem:[%s170 + $0x38] sm:$0x1] %vm2977, %v2880
      %2991 = vst.msk [vmem:[%s170 + $0x3c] sm:$0xf] %vm2974, %v2881
      %2992 = vst.msk [vmem:[%s170 + $0x40] sm:$0xf] %vm2974, %v2882
      %2993 = vst.msk [vmem:[%s170 + $0x44] sm:$0x1] %vm2977, %v2883
      %2994 = vst.msk [vmem:[%s170 + $0x48] sm:$0xf] %vm2974, %v2884
      %2995 = vst.msk [vmem:[%s170 + $0x4c] sm:$0xf] %vm2974, %v2885
      %2996 = vst.msk [vmem:[%s170 + $0x50] sm:$0x1] %vm2977, %v2886
      %2997 = vst.msk [vmem:[%s170 + $0x54] sm:$0xf] %vm2974, %v2887
      %2998 = vst.msk [vmem:[%s170 + $0x58] sm:$0xf] %vm2974, %v2888
      %2999 = vst.msk [vmem:[%s170 + $0x5c] sm:$0x1] %vm2977, %v2889
      %3000 = vst.msk [vmem:[%s170 + $0x60] sm:$0xf] %vm2974, %v2890
      %3001 = vst.msk [vmem:[%s170 + $0x64] sm:$0xf] %vm2974, %v2891
      %3002 = vst.msk [vmem:[%s170 + $0x68] sm:$0x1] %vm2977, %v2892
      %3003 = vst.msk [vmem:[%s170 + $0x6c] sm:$0xf] %vm2974, %v2893
      %3004 = vst.msk [vmem:[%s170 + $0x70] sm:$0xf] %vm2974, %v2894
      %3005 = vst.msk [vmem:[%s170 + $0x74] sm:$0x1] %vm2977, %v2895
      %3006 = vst.msk [vmem:[%s170 + $0x78] sm:$0xf] %vm2974, %v2896
      %3007 = vst.msk [vmem:[%s170 + $0x7c] sm:$0xf] %vm2974, %v2897
      %3008 = vst.msk [vmem:[%s170 + $0x80] sm:$0x1] %vm2977, %v2898
      %3009 = vst.msk [vmem:[%s170 + $0x84] sm:$0xf] %vm2974, %v2899
      %3010 = vst.msk [vmem:[%s170 + $0x88] sm:$0xf] %vm2974, %v2900
      %3011 = vst.msk [vmem:[%s170 + $0x8c] sm:$0x1] %vm2977, %v2901
      %3012 = vst.msk [vmem:[%s170 + $0x90] sm:$0xf] %vm2974, %v2902
      %3013 = vst.msk [vmem:[%s170 + $0x94] sm:$0xf] %vm2974, %v2903
      %3014 = vst.msk [vmem:[%s170 + $0x98] sm:$0x1] %vm2977, %v2904
      %3015 = vst.msk [vmem:[%s170 + $0x9c] sm:$0xf] %vm2974, %v2905
      %3016 = vst.msk [vmem:[%s170 + $0xa0] sm:$0xf] %vm2974, %v2906
      %3017 = vst.msk [vmem:[%s170 + $0xa4] sm:$0x1] %vm2977, %v2907
      %3018 = vst.msk [vmem:[%s170 + $0xa8] sm:$0xf] %vm2974, %v2908
      %3019 = vst.msk [vmem:[%s170 + $0xac] sm:$0xf] %vm2974, %v2909
      %3020 = vst.msk [vmem:[%s170 + $0xb0] sm:$0x1] %vm2977, %v2910
      %3021 = vst.msk [vmem:[%s170 + $0xb4] sm:$0xf] %vm2974, %v2911
      %3022 = vst.msk [vmem:[%s170 + $0xb8] sm:$0xf] %vm2974, %v2912
      %3023 = vst.msk [vmem:[%s170 + $0xbc] sm:$0x1] %vm2977, %v2913
      %3024 = vst.msk [vmem:[%s170 + $0xc0] sm:$0xf] %vm2974, %v2914
      %3025 = vst.msk [vmem:[%s170 + $0xc4] sm:$0xf] %vm2974, %v2915
      %3026 = vst.msk [vmem:[%s170 + $0xc8] sm:$0x1] %vm2977, %v2916
      %3027 = vst.msk [vmem:[%s170 + $0xcc] sm:$0xf] %vm2974, %v2917
      %3028 = vst.msk [vmem:[%s170 + $0xd0] sm:$0xf] %vm2974, %v2918
      %3029 = vst.msk [vmem:[%s170 + $0xd4] sm:$0x1] %vm2977, %v2919
      %p3030 = scmp.lt.s32.totalorder %s14, 1
      %s3031 = scalar_select %p3030, %s14, 1
      %s3032 = smul.addr %s3031, 54
      %s3033 = smul.addr %s3032, 4
      %s3034 = scalar_lea.vmem %s3, %s3033
      // Predicated region
      $region33: #{tpu_custom_call.1} parent=31 // pred_check
        %p3035 = pneg %p100
      $region34: #{tpu_custom_call.1} parent=31 // pred_check_branch
        %3037 = sbr.rel (%p3035) target = $region36
      $region35: #{tpu_custom_call.1} parent=31 // pred_region
        _
      $region36: #{tpu_custom_call.1} parent=31 // pred_fallthru
        _
    $region32: #{tpu_custom_call.1} parent=5 // pred_fallthru
      _
    %p3038 = scmp.le.s32.totalorder 2, %s9
    // Predicated region
    $region37: #{tpu_custom_call.1} parent=5 // pred_check
      %p3039 = pneg %p3038
    $region38: #{tpu_custom_call.1} parent=5 // pred_check_branch
      %3041 = sbr.rel (%p3039) target = $region40
    $region39: #{tpu_custom_call.1} parent=5 // pred_region
      %s3042 = ssub.s32 %s9, 2
      // Predicated region
      $region41: #{tpu_custom_call.1} parent=39 // pred_check
        %p3043 = pneg %p106
      $region42: #{tpu_custom_call.1} parent=39 // pred_check_branch
        %3045 = sbr.rel (%p3043) target = $region44
      $region43: #{tpu_custom_call.1} parent=39 // pred_region
        %p3046 = scmp.lt.s32.totalorder %s15, 1
        %s3047 = scalar_select %p3046, %s15, 1
        %s3048 = smul.addr %s3047, 54
        %s3049 = smul.addr %s3048, 4
        %s3050 = scalar_lea.vmem %s3, %s3049
      $region44: #{tpu_custom_call.1} parent=39 // pred_fallthru
        _
    $region40: #{tpu_custom_call.1} parent=5 // pred_fallthru
      _
  $region6: #{tpu_custom_call.1} parent=0 // loop_footer
    %s13 = sadd.s32 1, %s9
  $region7: #{tpu_custom_call.1} parent=0 // loop_footer_branch
    %8 = sbr.rel target = $region3
  $region8: #{tpu_custom_call.1} parent=0 // loop_exit
    _

</llo_original>
